<compile_context>
chip_gen: v6e
topology: v6e:2x2x1
jax: 0.10.0
libtpu: 0.0.40
codegen_flags: <defaults>
</compile_context>

<pallas_src>
import functools
import math

import jax
import jax.numpy as jnp
from jax import lax
from jax.experimental import pallas as pl
from jax.experimental.pallas import tpu as pltpu

# --- config (TransformerConfig defaults that matter for the forward pass) ---
HIDDEN = 16
MLP_DIM = 64
NUM_HEADS = 4
HEAD_DIM = HIDDEN // NUM_HEADS
EPS = 1e-5          # nn.LayerNorm default
VEC_WIDTH = 128     # lane width used for the packed 1-D parameter array
MAX_BLOCK_ROWS = 2048


def _shift_or_div(x, d):
    """Integer divide by a static positive int; use a cheap shift for powers of two."""
    if d > 0 and (d & (d - 1)) == 0:
        return jnp.right_shift(x, d.bit_length() - 1)
    return x // d


def _norm(x):
    """LayerNorm without gamma/beta (they are folded into the following projection)."""
    mu = jnp.mean(x, axis=-1, keepdims=True)
    var = jnp.mean((x - mu) ** 2, axis=-1, keepdims=True)
    return (x - mu) * lax.rsqrt(var + EPS)


def block_kernel(x_ref, wqkv_ref, wo_ref, w1_ref, w2_ref, vec_ref, o_ref, *, seq):
    x = x_ref[...]                               # (rb, H) f32, rb = bt * seq
    rb = x.shape[0]
    bt = rb // seq

    w_qkv = wqkv_ref[...]                        # (H, 3H) bf16, LN1 gamma/beta + qk-scale folded
    w_o = wo_ref[...]                            # (H, H)  bf16
    w_1 = w1_ref[...]                            # (H, MLP) bf16, LN2 gamma/beta folded
    w_2 = w2_ref[...]                            # (MLP, H) bf16

    vec = vec_ref[...]                           # (8, 128) f32
    b_qkv = vec[0:1, : 3 * HIDDEN]
    b_o = vec[1:2, :HIDDEN]
    b_1 = vec[2:3, :MLP_DIM]
    b_2 = vec[3:4, :HIDDEN]

    # --- ln1 (gamma/beta folded into w_qkv/b_qkv at pack time) ---
    xn = _norm(x)

    # --- fused QKV projection: one bf16 matmul producing (rb, 3H), then slice ---
    qkv = jnp.dot(xn.astype(jnp.bfloat16), w_qkv,
                  preferred_element_type=jnp.float32) + b_qkv
    # 1/sqrt(head_dim) already folded into the q columns of w_qkv / b_qkv.
    q = qkv[:, :HIDDEN].reshape(bt, seq, HIDDEN)
    k = qkv[:, HIDDEN:2 * HIDDEN].reshape(bt, seq, HIDDEN).astype(jnp.bfloat16)
    v = qkv[:, 2 * HIDDEN:].reshape(bt, seq, HIDDEN)

    # --- hoisted per-head column masks (head h owns hidden columns [h*HD, (h+1)*HD)) ---
    col = lax.broadcasted_iota(jnp.int32, (1, 1, HIDDEN), 2)
    head_id = _shift_or_div(col, HEAD_DIM)
    head_masks = [(head_id == h).astype(jnp.float32) for h in range(NUM_HEADS)]

    # --- multi-head attention, batched over the bt batches of the block ---
    attn = jnp.zeros((bt, seq, HIDDEN), jnp.float32)
    for h in range(NUM_HEADS):
        m = head_masks[h]
        # One-sided masking: zeroing the non-head-h columns of q kills the other heads'
        # contributions to the contraction regardless of k.
        qh = (q * m).astype(jnp.bfloat16)
        s = jnp.einsum('bqd,bkd->bqk', qh, k,
                       preferred_element_type=jnp.float32)            # (bt, S, S)
        s = s - jnp.max(s, axis=-1, keepdims=True)
        p = jnp.exp(s)
        inv_l = pl.reciprocal(jnp.sum(p, axis=-1, keepdims=True), approx=True)
        vh = (v * m).astype(jnp.bfloat16)
        oh = jnp.einsum('bqk,bkd->bqd', p.astype(jnp.bfloat16), vh,
                        preferred_element_type=jnp.float32)           # (bt, S, H)
        attn = attn + oh * inv_l                 # normalize after PV (small output, not p)

    attn2 = attn.reshape(rb, HIDDEN)
    attn2 = jnp.dot(attn2.astype(jnp.bfloat16), w_o,
                    preferred_element_type=jnp.float32) + b_o

    # residual 1
    x1 = attn2 + x

    # --- ln2 (gamma/beta folded into w_1/b_1) + MLP ---
    zn = _norm(x1)
    z = jnp.dot(zn.astype(jnp.bfloat16), w_1, preferred_element_type=jnp.float32) + b_1
    z = jnp.maximum(z, 0.0)
    z = jnp.dot(z.astype(jnp.bfloat16), w_2, preferred_element_type=jnp.float32) + b_2

    # residual 2
    o_ref[...] = (x1 + z).astype(o_ref.dtype)


def _pick_block_batches(B, S, max_rows=MAX_BLOCK_ROWS):
    """Pick batches-per-block: large blocks (<=max_rows rows, multiple of 8) while keeping
    grid >= 2 whenever B >= 2 so both v7x TensorCores get parallel work."""
    candidates = []
    for bt in range(1, B + 1):
        if B % bt:
            continue
        rb, grid = bt * S, B // bt
        if rb % 8 != 0 and grid != 1:
            continue                       # (8, *) sublane rule unless block == full array
        if rb > max_rows and bt > 1:
            continue                       # keep blocks modest; bt=1 is the floor
        candidates.append((bt, grid, rb))
    if not candidates:
        return B                           # single full-array block (always lowers)
    multi = [c for c in candidates if c[1] >= 2]
    pool = multi if multi else candidates
    return max(pool, key=lambda c: c[2])[0]


def encoder_decoder_block(x, kparams, decoder_mask=None):
    if decoder_mask is not None:
        # TODO(synk): decoder_mask (attn_mask) path not implemented in the kernel.
        raise NotImplementedError("decoder_mask is not supported by this Pallas kernel")

    wqkv, wo, w1m, w2m, vecs = kparams
    B, S, H = x.shape
    rows = B * S

    bt = _pick_block_batches(B, S)
    rb = bt * S

    x2 = x.reshape(rows, H)
    kernel = functools.partial(block_kernel, seq=S)

    out2 = pl.pallas_call(
        kernel,
        out_shape=jax.ShapeDtypeStruct((rows, H), x.dtype),
        grid=(rows // rb,),
        in_specs=[
            pl.BlockSpec((rb, H), lambda i: (i, 0)),
            pl.BlockSpec(wqkv.shape, lambda i: (0, 0)),
            pl.BlockSpec(wo.shape, lambda i: (0, 0)),
            pl.BlockSpec(w1m.shape, lambda i: (0, 0)),
            pl.BlockSpec(w2m.shape, lambda i: (0, 0)),
            pl.BlockSpec(vecs.shape, lambda i: (0, 0)),
        ],
        out_specs=pl.BlockSpec((rb, H), lambda i: (i, 0)),
        compiler_params=pltpu.CompilerParams(dimension_semantics=("parallel",)),
    )(x2, wqkv, wo, w1m, w2m, vecs)

    return out2.reshape(B, S, H)


def reference(x, raw):
    """Pure-JAX f32 ground truth matching the PyTorch module semantics."""
    (ln1_g, ln1_b, in_proj_w, in_proj_b, out_proj_w, out_proj_b,
     ln2_g, ln2_b, w1, b1, w2, b2) = raw
    B, S, H = x.shape

    def ln(y, g, b):
        mu = jnp.mean(y, axis=-1, keepdims=True)
        var = jnp.mean((y - mu) ** 2, axis=-1, keepdims=True)
        return (y - mu) * lax.rsqrt(var + EPS) * g + b

    xn = ln(x, ln1_g, ln1_b)
    qkv = xn @ in_proj_w.T + in_proj_b
    q, k, v = qkv[..., :H], qkv[..., H:2 * H], qkv[..., 2 * H:]

    def split(t):
        return t.reshape(B, S, NUM_HEADS, HEAD_DIM).transpose(0, 2, 1, 3)

    qh, kh, vh = split(q), split(k), split(v)
    s = jnp.einsum("bhqd,bhkd->bhqk", qh, kh) / math.sqrt(HEAD_DIM)
    p = jax.nn.softmax(s, axis=-1)
    o = jnp.einsum("bhqk,bhkd->bhqd", p, vh).transpose(0, 2, 1, 3).reshape(B, S, H)
    attn = o @ out_proj_w.T + out_proj_b
    x1 = attn + x
    zn = ln(x1, ln2_g, ln2_b)
    z = jnp.maximum(zn @ w1.T + b1, 0.0) @ w2.T + b2
    return x1 + z


def make_params(key):
    ks = jax.random.split(key, 12)
    # PyTorch-shaped parameters (nn.MultiheadAttention / nn.Linear conventions).
    in_proj_w = 0.2 * jax.random.normal(ks[0], (3 * HIDDEN, HIDDEN), jnp.float32)
    in_proj_b = 0.1 * jax.random.normal(ks[1], (3 * HIDDEN,), jnp.float32)
    out_proj_w = 0.2 * jax.random.normal(ks[2], (HIDDEN, HIDDEN), jnp.float32)
    out_proj_b = 0.1 * jax.random.normal(ks[3], (HIDDEN,), jnp.float32)
    w1 = 0.2 * jax.random.normal(ks[4], (MLP_DIM, HIDDEN), jnp.float32)   # dense1.weight
    b1 = 0.1 * jax.random.normal(ks[5], (MLP_DIM,), jnp.float32)
    w2 = 0.2 * jax.random.normal(ks[6], (HIDDEN, MLP_DIM), jnp.float32)   # dense2.weight
    b2 = 0.1 * jax.random.normal(ks[7], (HIDDEN,), jnp.float32)
    # Non-trivial LayerNorm affines so the pack-time folds are actually exercised.
    ln1_g = 1.0 + 0.1 * jax.random.normal(ks[8], (HIDDEN,), jnp.float32)
    ln1_b = 0.05 * jax.random.normal(ks[9], (HIDDEN,), jnp.float32)
    ln2_g = 1.0 + 0.1 * jax.random.normal(ks[10], (HIDDEN,), jnp.float32)
    ln2_b = 0.05 * jax.random.normal(ks[11], (HIDDEN,), jnp.float32)

    raw = (ln1_g, ln1_b, in_proj_w, in_proj_b, out_proj_w, out_proj_b,
           ln2_g, ln2_b, w1, b1, w2, b2)

    # --- pack for the kernel: pre-transpose so the kernel does row-major x @ W ---
    wq = in_proj_w[:HIDDEN].T                 # (H, H)
    wk = in_proj_w[HIDDEN:2 * HIDDEN].T
    wv = in_proj_w[2 * HIDDEN:].T
    w_qkv = jnp.concatenate([wq, wk, wv], axis=1)        # (H, 3H) f32

    # Fold LN1 gamma/beta into the fused QKV projection (pack-time, zero runtime cost).
    w_qkv_f = ln1_g[:, None] * w_qkv
    b_qkv_f = ln1_b @ w_qkv + in_proj_b
    # Fold the 1/sqrt(head_dim) attention scale into the q columns.
    scale = 1.0 / math.sqrt(HEAD_DIM)
    w_qkv_f = w_qkv_f.at[:, :HIDDEN].multiply(scale)
    b_qkv_f = b_qkv_f.at[:HIDDEN].multiply(scale)

    wo = out_proj_w.T                         # (H, H)
    # Fold LN2 gamma/beta into dense1.
    w1t = w1.T                                # (H, MLP)
    w1_f = ln2_g[:, None] * w1t
    b1_f = ln2_b @ w1t + b1
    w2t = w2.T                                # (MLP, H)

    wqkv_bf = w_qkv_f.astype(jnp.bfloat16)
    wo_bf = wo.astype(jnp.bfloat16)
    w1_bf = w1_f.astype(jnp.bfloat16)
    w2_bf = w2t.astype(jnp.bfloat16)

    def row(v):
        v = v.reshape(1, -1)
        return jnp.pad(v, ((0, 0), (0, VEC_WIDTH - v.shape[1])))

    # all 1-D params packed into a single (8, 128) f32 array (kept f32: added in f32)
    vecs = jnp.concatenate([
        row(b_qkv_f),                         # fused (scaled) q|k|v bias, 48 wide
        row(out_proj_b),
        row(b1_f),
        row(b2),
        jnp.zeros((4, VEC_WIDTH), jnp.float32),   # pad to 8 sublanes
    ], axis=0)

    return raw, (wqkv_bf, wo_bf, w1_bf, w2_bf, vecs)


if __name__ == "__main__":
    key = jax.random.PRNGKey(0)
    kx, kp = jax.random.split(key)

    B, S = 2, 8
    x = jax.random.normal(kx, (B, S, HIDDEN), jnp.float32)
    raw, kparams = make_params(kp)

    out = jax.block_until_ready(encoder_decoder_block(x, kparams))

    ref = reference(x, raw)
    err = float(jnp.max(jnp.abs(out - ref)))
    # bf16 matmul operands (f32 accumulate) vs. the pure-f32 reference: expected max abs
    # error is ~1e-2 at these magnitudes; 5e-2 still catches any structural/semantic bug.
    assert err < 5e-2, f"mismatch vs reference: {err}"

    print("KERNEL_OK")
</pallas_src>

<mosaic_0001>
module attributes {stable_mosaic.version = 11 : i64} {
  func.func @block_kernel(%arg0: i32, %arg1: memref<8x16xf32, #tpu.memory_space<vmem>>, %arg2: memref<16x48xbf16, #tpu.memory_space<vmem>>, %arg3: memref<16x16xbf16, #tpu.memory_space<vmem>>, %arg4: memref<16x64xbf16, #tpu.memory_space<vmem>>, %arg5: memref<64x16xbf16, #tpu.memory_space<vmem>>, %arg6: memref<8x128xf32, #tpu.memory_space<vmem>>, %arg7: memref<8x16xf32, #tpu.memory_space<vmem>>) attributes {dimension_semantics = [#tpu.dimension_semantics<parallel>], iteration_bounds = array<i64: 2>, scalar_prefetch = 0 : i64, scratch_operands = 0 : i64, tpu.core_type = #tpu.core_type<tc>, window_params = [{transform_indices = @transform_0, window_bounds = array<i64: 8, 16>}, {pipeline_mode = #tpu.pipeline_mode<synchronous>, transform_indices = @transform_1, window_bounds = array<i64: 16, 48>}, {pipeline_mode = #tpu.pipeline_mode<synchronous>, transform_indices = @transform_2, window_bounds = array<i64: 16, 16>}, {pipeline_mode = #tpu.pipeline_mode<synchronous>, transform_indices = @transform_3, window_bounds = array<i64: 16, 64>}, {pipeline_mode = #tpu.pipeline_mode<synchronous>, transform_indices = @transform_4, window_bounds = array<i64: 64, 16>}, {pipeline_mode = #tpu.pipeline_mode<synchronous>, transform_indices = @transform_5, window_bounds = array<i64: 8, 128>}, {transform_indices = @transform_6, window_bounds = array<i64: 8, 16>}]} {
    %c0 = arith.constant 0 : index
    %c0_0 = arith.constant 0 : index
    %0 = vector.load %arg1[%c0, %c0_0] : memref<8x16xf32, #tpu.memory_space<vmem>>, vector<8x16xf32>
    %c0_1 = arith.constant 0 : index
    %c0_2 = arith.constant 0 : index
    %1 = vector.load %arg2[%c0_1, %c0_2] : memref<16x48xbf16, #tpu.memory_space<vmem>>, vector<16x48xbf16>
    %c0_3 = arith.constant 0 : index
    %c0_4 = arith.constant 0 : index
    %2 = vector.load %arg3[%c0_3, %c0_4] : memref<16x16xbf16, #tpu.memory_space<vmem>>, vector<16x16xbf16>
    %c0_5 = arith.constant 0 : index
    %c0_6 = arith.constant 0 : index
    %3 = vector.load %arg4[%c0_5, %c0_6] : memref<16x64xbf16, #tpu.memory_space<vmem>>, vector<16x64xbf16>
    %c0_7 = arith.constant 0 : index
    %c0_8 = arith.constant 0 : index
    %4 = vector.load %arg5[%c0_7, %c0_8] : memref<64x16xbf16, #tpu.memory_space<vmem>>, vector<64x16xbf16>
    %c0_9 = arith.constant 0 : index
    %c0_10 = arith.constant 0 : index
    %5 = vector.load %arg6[%c0_9, %c0_10] : memref<8x128xf32, #tpu.memory_space<vmem>>, vector<8x128xf32>
    %6 = vector.extract_strided_slice %5 {offsets = [0, 0], sizes = [1, 48], strides = [1, 1]} : vector<8x128xf32> to vector<1x48xf32>
    %7 = vector.extract_strided_slice %5 {offsets = [1, 0], sizes = [1, 16], strides = [1, 1]} : vector<8x128xf32> to vector<1x16xf32>
    %8 = vector.extract_strided_slice %5 {offsets = [2, 0], sizes = [1, 64], strides = [1, 1]} : vector<8x128xf32> to vector<1x64xf32>
    %9 = vector.extract_strided_slice %5 {offsets = [3, 0], sizes = [1, 16], strides = [1, 1]} : vector<8x128xf32> to vector<1x16xf32>
    %cst = arith.constant dense<0.000000e+00> : vector<8xf32>
    %10 = vector.multi_reduction <add>, %0, %cst [1] : vector<8x16xf32> to vector<8xf32>
    %11 = vector.shape_cast %10 : vector<8xf32> to vector<8x1xf32>
    %cst_11 = arith.constant 1.600000e+01 : f32
    %12 = vector.broadcast %cst_11 : f32 to vector<8x1xf32>
    %13 = arith.divf %11, %12 : vector<8x1xf32>
    %14 = vector.broadcast %13 : vector<8x1xf32> to vector<8x16xf32>
    %15 = arith.subf %0, %14 : vector<8x16xf32>
    %16 = arith.mulf %15, %15 : vector<8x16xf32>
    %cst_12 = arith.constant dense<0.000000e+00> : vector<8xf32>
    %17 = vector.multi_reduction <add>, %16, %cst_12 [1] : vector<8x16xf32> to vector<8xf32>
    %18 = vector.shape_cast %17 : vector<8xf32> to vector<8x1xf32>
    %cst_13 = arith.constant 1.600000e+01 : f32
    %19 = vector.broadcast %cst_13 : f32 to vector<8x1xf32>
    %20 = arith.divf %18, %19 : vector<8x1xf32>
    %21 = vector.broadcast %13 : vector<8x1xf32> to vector<8x16xf32>
    %22 = arith.subf %0, %21 : vector<8x16xf32>
    %cst_14 = arith.constant 9.99999974E-6 : f32
    %23 = vector.broadcast %cst_14 : f32 to vector<8x1xf32>
    %24 = arith.addf %20, %23 : vector<8x1xf32>
    %25 = math.rsqrt %24 : vector<8x1xf32>
    %26 = vector.broadcast %25 : vector<8x1xf32> to vector<8x16xf32>
    %27 = arith.mulf %22, %26 : vector<8x16xf32>
    %28 = arith.truncf %27 : vector<8x16xf32> to vector<8x16xbf16>
    %cst_15 = arith.constant dense<0.000000e+00> : vector<8x48xf32>
    %29 = tpu.matmul %28, %1, %cst_15 {dimension_numbers = #tpu.dot_dimension_numbers<[1], [0], [0], [1], [0, 0, 1, 1], [], []>} : vector<8x16xbf16>, vector<16x48xbf16>, vector<8x48xf32> -> vector<8x48xf32>
    %30 = vector.broadcast %6 : vector<1x48xf32> to vector<8x48xf32>
    %31 = arith.addf %29, %30 : vector<8x48xf32>
    %32 = vector.extract_strided_slice %31 {offsets = [0, 0], sizes = [8, 16], strides = [1, 1]} : vector<8x48xf32> to vector<8x16xf32>
    %33 = vector.shape_cast %32 : vector<8x16xf32> to vector<1x8x16xf32>
    %34 = vector.extract_strided_slice %31 {offsets = [0, 16], sizes = [8, 16], strides = [1, 1]} : vector<8x48xf32> to vector<8x16xf32>
    %35 = vector.shape_cast %34 : vector<8x16xf32> to vector<1x8x16xf32>
    %36 = arith.truncf %35 : vector<1x8x16xf32> to vector<1x8x16xbf16>
    %37 = vector.extract_strided_slice %31 {offsets = [0, 32], sizes = [8, 16], strides = [1, 1]} : vector<8x48xf32> to vector<8x16xf32>
    %38 = vector.shape_cast %37 : vector<8x16xf32> to vector<1x8x16xf32>
    %39 = tpu.iota {dimensions = array<i32: 2>} : vector<1x1x16xi32>
    %c2_i32 = arith.constant 2 : i32
    %40 = vector.broadcast %c2_i32 : i32 to vector<1x1x16xi32>
    %41 = arith.shrsi %39, %40 : vector<1x1x16xi32>
    %c0_i32 = arith.constant 0 : i32
    %42 = vector.broadcast %c0_i32 : i32 to vector<1x1x16xi32>
    %43 = arith.cmpi eq, %41, %42 : vector<1x1x16xi32>
    %44 = arith.extui %43 : vector<1x1x16xi1> to vector<1x1x16xi32>
    %45 = arith.sitofp %44 : vector<1x1x16xi32> to vector<1x1x16xf32>
    %c1_i32 = arith.constant 1 : i32
    %46 = vector.broadcast %c1_i32 : i32 to vector<1x1x16xi32>
    %47 = arith.cmpi eq, %41, %46 : vector<1x1x16xi32>
    %48 = arith.extui %47 : vector<1x1x16xi1> to vector<1x1x16xi32>
    %49 = arith.sitofp %48 : vector<1x1x16xi32> to vector<1x1x16xf32>
    %c2_i32_16 = arith.constant 2 : i32
    %50 = vector.broadcast %c2_i32_16 : i32 to vector<1x1x16xi32>
    %51 = arith.cmpi eq, %41, %50 : vector<1x1x16xi32>
    %52 = arith.extui %51 : vector<1x1x16xi1> to vector<1x1x16xi32>
    %53 = arith.sitofp %52 : vector<1x1x16xi32> to vector<1x1x16xf32>
    %c3_i32 = arith.constant 3 : i32
    %54 = vector.broadcast %c3_i32 : i32 to vector<1x1x16xi32>
    %55 = arith.cmpi eq, %41, %54 : vector<1x1x16xi32>
    %56 = arith.extui %55 : vector<1x1x16xi1> to vector<1x1x16xi32>
    %57 = arith.sitofp %56 : vector<1x1x16xi32> to vector<1x1x16xf32>
    %cst_17 = arith.constant 0.000000e+00 : f32
    %58 = vector.broadcast %cst_17 : f32 to vector<1x8x16xf32>
    %59 = vector.broadcast %45 : vector<1x1x16xf32> to vector<1x8x16xf32>
    %60 = arith.mulf %33, %59 : vector<1x8x16xf32>
    %61 = arith.truncf %60 : vector<1x8x16xf32> to vector<1x8x16xbf16>
    "tpu.trace_start"() <{level = 10 : i32, message = "bqd,bkd->bqk"}> : () -> ()
    %cst_18 = arith.constant dense<0.000000e+00> : vector<1x8x8xf32>
    %62 = tpu.matmul %61, %36, %cst_18 {dimension_numbers = #tpu.dot_dimension_numbers<[2], [2], [1], [1], [0, 0, 0, 1, 1, 1], [0], [0]>} : vector<1x8x16xbf16>, vector<1x8x16xbf16>, vector<1x8x8xf32> -> vector<1x8x8xf32>
    "tpu.trace_stop"() : () -> ()
    %cst_19 = arith.constant dense<0xFF800000> : vector<1x8xf32>
    %63 = vector.multi_reduction <maximumf>, %62, %cst_19 [2] : vector<1x8x8xf32> to vector<1x8xf32>
    %64 = vector.shape_cast %63 : vector<1x8xf32> to vector<1x8x1xf32>
    %65 = vector.broadcast %64 : vector<1x8x1xf32> to vector<1x8x8xf32>
    %66 = arith.subf %62, %65 : vector<1x8x8xf32>
    %67 = math.exp %66 : vector<1x8x8xf32>
    %cst_20 = arith.constant dense<0.000000e+00> : vector<1x8xf32>
    %68 = vector.multi_reduction <add>, %67, %cst_20 [2] : vector<1x8x8xf32> to vector<1x8xf32>
    %69 = vector.shape_cast %68 : vector<1x8xf32> to vector<1x8x1xf32>
    %70 = tpu.reciprocal %69 {approx = true} : vector<1x8x1xf32> -> vector<1x8x1xf32>
    %71 = vector.broadcast %45 : vector<1x1x16xf32> to vector<1x8x16xf32>
    %72 = arith.mulf %38, %71 : vector<1x8x16xf32>
    %73 = arith.truncf %72 : vector<1x8x16xf32> to vector<1x8x16xbf16>
    %74 = arith.truncf %67 : vector<1x8x8xf32> to vector<1x8x8xbf16>
    "tpu.trace_start"() <{level = 10 : i32, message = "bqk,bkd->bqd"}> : () -> ()
    %cst_21 = arith.constant dense<0.000000e+00> : vector<1x8x16xf32>
    %75 = tpu.matmul %74, %73, %cst_21 {dimension_numbers = #tpu.dot_dimension_numbers<[2], [1], [1], [2], [0, 0, 0, 1, 1, 2], [0], [0]>} : vector<1x8x8xbf16>, vector<1x8x16xbf16>, vector<1x8x16xf32> -> vector<1x8x16xf32>
    "tpu.trace_stop"() : () -> ()
    %76 = vector.broadcast %70 : vector<1x8x1xf32> to vector<1x8x16xf32>
    %77 = arith.mulf %75, %76 : vector<1x8x16xf32>
    %78 = arith.addf %58, %77 : vector<1x8x16xf32>
    %79 = vector.broadcast %49 : vector<1x1x16xf32> to vector<1x8x16xf32>
    %80 = arith.mulf %33, %79 : vector<1x8x16xf32>
    %81 = arith.truncf %80 : vector<1x8x16xf32> to vector<1x8x16xbf16>
    "tpu.trace_start"() <{level = 10 : i32, message = "bqd,bkd->bqk"}> : () -> ()
    %cst_22 = arith.constant dense<0.000000e+00> : vector<1x8x8xf32>
    %82 = tpu.matmul %81, %36, %cst_22 {dimension_numbers = #tpu.dot_dimension_numbers<[2], [2], [1], [1], [0, 0, 0, 1, 1, 1], [0], [0]>} : vector<1x8x16xbf16>, vector<1x8x16xbf16>, vector<1x8x8xf32> -> vector<1x8x8xf32>
    "tpu.trace_stop"() : () -> ()
    %cst_23 = arith.constant dense<0xFF800000> : vector<1x8xf32>
    %83 = vector.multi_reduction <maximumf>, %82, %cst_23 [2] : vector<1x8x8xf32> to vector<1x8xf32>
    %84 = vector.shape_cast %83 : vector<1x8xf32> to vector<1x8x1xf32>
    %85 = vector.broadcast %84 : vector<1x8x1xf32> to vector<1x8x8xf32>
    %86 = arith.subf %82, %85 : vector<1x8x8xf32>
    %87 = math.exp %86 : vector<1x8x8xf32>
    %cst_24 = arith.constant dense<0.000000e+00> : vector<1x8xf32>
    %88 = vector.multi_reduction <add>, %87, %cst_24 [2] : vector<1x8x8xf32> to vector<1x8xf32>
    %89 = vector.shape_cast %88 : vector<1x8xf32> to vector<1x8x1xf32>
    %90 = tpu.reciprocal %89 {approx = true} : vector<1x8x1xf32> -> vector<1x8x1xf32>
    %91 = vector.broadcast %49 : vector<1x1x16xf32> to vector<1x8x16xf32>
    %92 = arith.mulf %38, %91 : vector<1x8x16xf32>
    %93 = arith.truncf %92 : vector<1x8x16xf32> to vector<1x8x16xbf16>
    %94 = arith.truncf %87 : vector<1x8x8xf32> to vector<1x8x8xbf16>
    "tpu.trace_start"() <{level = 10 : i32, message = "bqk,bkd->bqd"}> : () -> ()
    %cst_25 = arith.constant dense<0.000000e+00> : vector<1x8x16xf32>
    %95 = tpu.matmul %94, %93, %cst_25 {dimension_numbers = #tpu.dot_dimension_numbers<[2], [1], [1], [2], [0, 0, 0, 1, 1, 2], [0], [0]>} : vector<1x8x8xbf16>, vector<1x8x16xbf16>, vector<1x8x16xf32> -> vector<1x8x16xf32>
    "tpu.trace_stop"() : () -> ()
    %96 = vector.broadcast %90 : vector<1x8x1xf32> to vector<1x8x16xf32>
    %97 = arith.mulf %95, %96 : vector<1x8x16xf32>
    %98 = arith.addf %78, %97 : vector<1x8x16xf32>
    %99 = vector.broadcast %53 : vector<1x1x16xf32> to vector<1x8x16xf32>
    %100 = arith.mulf %33, %99 : vector<1x8x16xf32>
    %101 = arith.truncf %100 : vector<1x8x16xf32> to vector<1x8x16xbf16>
    "tpu.trace_start"() <{level = 10 : i32, message = "bqd,bkd->bqk"}> : () -> ()
    %cst_26 = arith.constant dense<0.000000e+00> : vector<1x8x8xf32>
    %102 = tpu.matmul %101, %36, %cst_26 {dimension_numbers = #tpu.dot_dimension_numbers<[2], [2], [1], [1], [0, 0, 0, 1, 1, 1], [0], [0]>} : vector<1x8x16xbf16>, vector<1x8x16xbf16>, vector<1x8x8xf32> -> vector<1x8x8xf32>
    "tpu.trace_stop"() : () -> ()
    %cst_27 = arith.constant dense<0xFF800000> : vector<1x8xf32>
    %103 = vector.multi_reduction <maximumf>, %102, %cst_27 [2] : vector<1x8x8xf32> to vector<1x8xf32>
    %104 = vector.shape_cast %103 : vector<1x8xf32> to vector<1x8x1xf32>
    %105 = vector.broadcast %104 : vector<1x8x1xf32> to vector<1x8x8xf32>
    %106 = arith.subf %102, %105 : vector<1x8x8xf32>
    %107 = math.exp %106 : vector<1x8x8xf32>
    %cst_28 = arith.constant dense<0.000000e+00> : vector<1x8xf32>
    %108 = vector.multi_reduction <add>, %107, %cst_28 [2] : vector<1x8x8xf32> to vector<1x8xf32>
    %109 = vector.shape_cast %108 : vector<1x8xf32> to vector<1x8x1xf32>
    %110 = tpu.reciprocal %109 {approx = true} : vector<1x8x1xf32> -> vector<1x8x1xf32>
    %111 = vector.broadcast %53 : vector<1x1x16xf32> to vector<1x8x16xf32>
    %112 = arith.mulf %38, %111 : vector<1x8x16xf32>
    %113 = arith.truncf %112 : vector<1x8x16xf32> to vector<1x8x16xbf16>
    %114 = arith.truncf %107 : vector<1x8x8xf32> to vector<1x8x8xbf16>
    "tpu.trace_start"() <{level = 10 : i32, message = "bqk,bkd->bqd"}> : () -> ()
    %cst_29 = arith.constant dense<0.000000e+00> : vector<1x8x16xf32>
    %115 = tpu.matmul %114, %113, %cst_29 {dimension_numbers = #tpu.dot_dimension_numbers<[2], [1], [1], [2], [0, 0, 0, 1, 1, 2], [0], [0]>} : vector<1x8x8xbf16>, vector<1x8x16xbf16>, vector<1x8x16xf32> -> vector<1x8x16xf32>
    "tpu.trace_stop"() : () -> ()
    %116 = vector.broadcast %110 : vector<1x8x1xf32> to vector<1x8x16xf32>
    %117 = arith.mulf %115, %116 : vector<1x8x16xf32>
    %118 = arith.addf %98, %117 : vector<1x8x16xf32>
    %119 = vector.broadcast %57 : vector<1x1x16xf32> to vector<1x8x16xf32>
    %120 = arith.mulf %33, %119 : vector<1x8x16xf32>
    %121 = arith.truncf %120 : vector<1x8x16xf32> to vector<1x8x16xbf16>
    "tpu.trace_start"() <{level = 10 : i32, message = "bqd,bkd->bqk"}> : () -> ()
    %cst_30 = arith.constant dense<0.000000e+00> : vector<1x8x8xf32>
    %122 = tpu.matmul %121, %36, %cst_30 {dimension_numbers = #tpu.dot_dimension_numbers<[2], [2], [1], [1], [0, 0, 0, 1, 1, 1], [0], [0]>} : vector<1x8x16xbf16>, vector<1x8x16xbf16>, vector<1x8x8xf32> -> vector<1x8x8xf32>
    "tpu.trace_stop"() : () -> ()
    %cst_31 = arith.constant dense<0xFF800000> : vector<1x8xf32>
    %123 = vector.multi_reduction <maximumf>, %122, %cst_31 [2] : vector<1x8x8xf32> to vector<1x8xf32>
    %124 = vector.shape_cast %123 : vector<1x8xf32> to vector<1x8x1xf32>
    %125 = vector.broadcast %124 : vector<1x8x1xf32> to vector<1x8x8xf32>
    %126 = arith.subf %122, %125 : vector<1x8x8xf32>
    %127 = math.exp %126 : vector<1x8x8xf32>
    %cst_32 = arith.constant dense<0.000000e+00> : vector<1x8xf32>
    %128 = vector.multi_reduction <add>, %127, %cst_32 [2] : vector<1x8x8xf32> to vector<1x8xf32>
    %129 = vector.shape_cast %128 : vector<1x8xf32> to vector<1x8x1xf32>
    %130 = tpu.reciprocal %129 {approx = true} : vector<1x8x1xf32> -> vector<1x8x1xf32>
    %131 = vector.broadcast %57 : vector<1x1x16xf32> to vector<1x8x16xf32>
    %132 = arith.mulf %38, %131 : vector<1x8x16xf32>
    %133 = arith.truncf %132 : vector<1x8x16xf32> to vector<1x8x16xbf16>
    %134 = arith.truncf %127 : vector<1x8x8xf32> to vector<1x8x8xbf16>
    "tpu.trace_start"() <{level = 10 : i32, message = "bqk,bkd->bqd"}> : () -> ()
    %cst_33 = arith.constant dense<0.000000e+00> : vector<1x8x16xf32>
    %135 = tpu.matmul %134, %133, %cst_33 {dimension_numbers = #tpu.dot_dimension_numbers<[2], [1], [1], [2], [0, 0, 0, 1, 1, 2], [0], [0]>} : vector<1x8x8xbf16>, vector<1x8x16xbf16>, vector<1x8x16xf32> -> vector<1x8x16xf32>
    "tpu.trace_stop"() : () -> ()
    %136 = vector.broadcast %130 : vector<1x8x1xf32> to vector<1x8x16xf32>
    %137 = arith.mulf %135, %136 : vector<1x8x16xf32>
    %138 = arith.addf %118, %137 : vector<1x8x16xf32>
    %139 = vector.shape_cast %138 : vector<1x8x16xf32> to vector<8x16xf32>
    %140 = arith.truncf %139 : vector<8x16xf32> to vector<8x16xbf16>
    %cst_34 = arith.constant dense<0.000000e+00> : vector<8x16xf32>
    %141 = tpu.matmul %140, %2, %cst_34 {dimension_numbers = #tpu.dot_dimension_numbers<[1], [0], [0], [1], [0, 0, 1, 1], [], []>} : vector<8x16xbf16>, vector<16x16xbf16>, vector<8x16xf32> -> vector<8x16xf32>
    %142 = vector.broadcast %7 : vector<1x16xf32> to vector<8x16xf32>
    %143 = arith.addf %141, %142 : vector<8x16xf32>
    %144 = arith.addf %143, %0 : vector<8x16xf32>
    %cst_35 = arith.constant dense<0.000000e+00> : vector<8xf32>
    %145 = vector.multi_reduction <add>, %144, %cst_35 [1] : vector<8x16xf32> to vector<8xf32>
    %146 = vector.shape_cast %145 : vector<8xf32> to vector<8x1xf32>
    %cst_36 = arith.constant 1.600000e+01 : f32
    %147 = vector.broadcast %cst_36 : f32 to vector<8x1xf32>
    %148 = arith.divf %146, %147 : vector<8x1xf32>
    %149 = vector.broadcast %148 : vector<8x1xf32> to vector<8x16xf32>
    %150 = arith.subf %144, %149 : vector<8x16xf32>
    %151 = arith.mulf %150, %150 : vector<8x16xf32>
    %cst_37 = arith.constant dense<0.000000e+00> : vector<8xf32>
    %152 = vector.multi_reduction <add>, %151, %cst_37 [1] : vector<8x16xf32> to vector<8xf32>
    %153 = vector.shape_cast %152 : vector<8xf32> to vector<8x1xf32>
    %cst_38 = arith.constant 1.600000e+01 : f32
    %154 = vector.broadcast %cst_38 : f32 to vector<8x1xf32>
    %155 = arith.divf %153, %154 : vector<8x1xf32>
    %156 = vector.broadcast %148 : vector<8x1xf32> to vector<8x16xf32>
    %157 = arith.subf %144, %156 : vector<8x16xf32>
    %cst_39 = arith.constant 9.99999974E-6 : f32
    %158 = vector.broadcast %cst_39 : f32 to vector<8x1xf32>
    %159 = arith.addf %155, %158 : vector<8x1xf32>
    %160 = math.rsqrt %159 : vector<8x1xf32>
    %161 = vector.broadcast %160 : vector<8x1xf32> to vector<8x16xf32>
    %162 = arith.mulf %157, %161 : vector<8x16xf32>
    %163 = arith.truncf %162 : vector<8x16xf32> to vector<8x16xbf16>
    %cst_40 = arith.constant dense<0.000000e+00> : vector<8x64xf32>
    %164 = tpu.matmul %163, %3, %cst_40 {dimension_numbers = #tpu.dot_dimension_numbers<[1], [0], [0], [1], [0, 0, 1, 1], [], []>} : vector<8x16xbf16>, vector<16x64xbf16>, vector<8x64xf32> -> vector<8x64xf32>
    %165 = vector.broadcast %8 : vector<1x64xf32> to vector<8x64xf32>
    %166 = arith.addf %164, %165 : vector<8x64xf32>
    %cst_41 = arith.constant 0.000000e+00 : f32
    %167 = vector.broadcast %cst_41 : f32 to vector<8x64xf32>
    %168 = arith.maximumf %166, %167 : vector<8x64xf32>
    %169 = arith.truncf %168 : vector<8x64xf32> to vector<8x64xbf16>
    %cst_42 = arith.constant dense<0.000000e+00> : vector<8x16xf32>
    %170 = tpu.matmul %169, %4, %cst_42 {dimension_numbers = #tpu.dot_dimension_numbers<[1], [0], [0], [1], [0, 0, 1, 1], [], []>} : vector<8x64xbf16>, vector<64x16xbf16>, vector<8x16xf32> -> vector<8x16xf32>
    %171 = vector.broadcast %9 : vector<1x16xf32> to vector<8x16xf32>
    %172 = arith.addf %170, %171 : vector<8x16xf32>
    %173 = arith.addf %144, %172 : vector<8x16xf32>
    %c0_43 = arith.constant 0 : index
    %c0_44 = arith.constant 0 : index
    %174 = vector.load %arg7[%c0_43, %c0_44] : memref<8x16xf32, #tpu.memory_space<vmem>>, vector<8x16xf32>
    tpu.vector_store %arg7[%c0_43, %c0_44], %173 {strides = array<i32>} : memref<8x16xf32, #tpu.memory_space<vmem>>, vector<8x16xf32>,
    return
  }
  func.func @transform_0(%arg0: i32) -> (i32, i32) {
    %c0_i32 = arith.constant 0 : i32
    %c0_i32_0 = arith.constant 0 : i32
    return %arg0, %c0_i32 : i32, i32
  }
  func.func @transform_1(%arg0: i32) -> (i32, i32) {
    %c0_i32 = arith.constant 0 : i32
    %c0_i32_0 = arith.constant 0 : i32
    %c0_i32_1 = arith.constant 0 : i32
    return %c0_i32, %c0_i32_0 : i32, i32
  }
  func.func @transform_2(%arg0: i32) -> (i32, i32) {
    %c0_i32 = arith.constant 0 : i32
    %c0_i32_0 = arith.constant 0 : i32
    %c0_i32_1 = arith.constant 0 : i32
    return %c0_i32, %c0_i32_0 : i32, i32
  }
  func.func @transform_3(%arg0: i32) -> (i32, i32) {
    %c0_i32 = arith.constant 0 : i32
    %c0_i32_0 = arith.constant 0 : i32
    %c0_i32_1 = arith.constant 0 : i32
    return %c0_i32, %c0_i32_0 : i32, i32
  }
  func.func @transform_4(%arg0: i32) -> (i32, i32) {
    %c0_i32 = arith.constant 0 : i32
    %c0_i32_0 = arith.constant 0 : i32
    %c0_i32_1 = arith.constant 0 : i32
    return %c0_i32, %c0_i32_0 : i32, i32
  }
  func.func @transform_5(%arg0: i32) -> (i32, i32) {
    %c0_i32 = arith.constant 0 : i32
    %c0_i32_0 = arith.constant 0 : i32
    %c0_i32_1 = arith.constant 0 : i32
    return %c0_i32, %c0_i32_0 : i32, i32
  }
  func.func @transform_6(%arg0: i32) -> (i32, i32) {
    %c0_i32 = arith.constant 0 : i32
    %c0_i32_0 = arith.constant 0 : i32
    return %arg0, %c0_i32 : i32, i32
  }
}

</mosaic_0001>

<llo_original>
// kernel: tpu_custom_call.1
$region0: #{tpu_custom_call.1}
  #allocation0 [shape = 'u32[]', space=smem, size = 0x4, offset = 0x4, fixed_abs, tag = 'smem constant byte address 0x4 - core index']
  #allocation1 [shape = 'u32[144,128]{1,0:T(1,128)}', space=vmem, size = 0x12000, scoped, tag = 'internal scratch']
  %s0 = inlined_call_operand.vmem [shape: f32[16,16], index: 0, kind: input, shape index: {}]
  %s1 = inlined_call_operand.vmem [shape: bf16[16,48], index: 1, kind: input, shape index: {}]
  %s2 = inlined_call_operand.vmem [shape: bf16[16,16], index: 2, kind: input, shape index: {}]
  %s3 = inlined_call_operand.vmem [shape: bf16[16,64], index: 3, kind: input, shape index: {}]
  %s4 = inlined_call_operand.vmem [shape: bf16[64,16], index: 4, kind: input, shape index: {}]
  %s5 = inlined_call_operand.vmem [shape: f32[8,128], index: 5, kind: input, shape index: {}]
  %s6 = inlined_call_operand.hbm [shape: f32[16,16], index: 6, kind: output, shape index: {}]
  %s7 = sld [smem:[#allocation0]]
  $region57: #{tpu_custom_call.1} parent=0
    _
  %s9 = ssub.s32 1, %s7
  %s10 = scalar_select 0, %s9, %s7
  $region1: #{tpu_custom_call.1} parent=0
    #allocation2 [shape = 'u8[8192]{0}', space=vmem, size = 0x2000, scoped, tag = 'output window, operand 0']
    #allocation3 [shape = 's32[2]{0}', space=sflag, size = 0x8, scoped, tag = 'scoped memory for tpu_custom_call.1']
    %11 = vsyncpa [#allocation3], 0
    %s12 = scalar_lea.sflag [#allocation3], 1
    %13 = vsyncpa %s12, 0
    loop: start=0, step=1, limit=4
    $region2: #{tpu_custom_call.1} parent=1 // loop_pre_header
      _
    $region3: #{tpu_custom_call.1} parent=1 // loop_header
      %s15 = sphi 0, %s19
      %p16 = scmp.ge.s32.totalorder %s15, 4
      %s25 = sphi 0, %s27
      %s28 = sphi 0, %s25
      %s29 = sphi 0, %s28
      %s45 = sphi 0, %s29
      %s49 = sphi 0, %s49
      %s51 = sphi 0, %s49
      %s52 = sphi 0, %s51
      %s66 = sphi 0, %s52
      %s70 = sphi 0, %s70
      %s72 = sphi 0, %s70
      %s73 = sphi 0, %s72
      %s87 = sphi 0, %s73
      %s91 = sphi 0, %s91
      %s93 = sphi 0, %s91
      %s94 = sphi 0, %s93
      %s108 = sphi 0, %s94
      %s112 = sphi 0, %s112
      %s114 = sphi 0, %s112
      %s115 = sphi 0, %s114
      %s129 = sphi 0, %s115
      %s133 = sphi 0, %s133
      %s135 = sphi 0, %s133
      %s136 = sphi 0, %s135
      %s150 = sphi 0, %s136
      %s156 = sphi 0, %s158
      %s159 = sphi 0, %s156
      %s160 = sphi 0, %s159
      %s176 = sphi 0, %s160
    $region4: #{tpu_custom_call.1} parent=1 // loop_header_branch
      %18 = sbr.rel (%p16) target = $region8
    $region5: #{tpu_custom_call.1} parent=1 // loop_body
      %s20 = ssub.s32 %s15, 1
      %s21 = ssub.s32 %s15, 2
      %s22 = sadd.s32 %s15, 1
      %s23 = ssub.s32 %s15, %s22
      %p24 = scmp.eq.s32.totalorder %s23, 0
      %s26 = sadd.s32 %s25, 1
      %s27 = scalar_select %p24, %s25, %s26
      %p30 = pneg %p24
      %p31 = scmp.eq.s32.totalorder %s15, 1
      %p32 = por %p30, %p31
      %p33 = scmp.ne.s32.totalorder %s25, %s28
      %p34 = scmp.eq.s32.totalorder %s15, 0
      %p35 = por %p33, %p34
      %p36 = scmp.ne.s32.totalorder %s25, %s28
      %p37 = scmp.eq.s32.totalorder %s20, 1
      %p38 = por %p36, %p37
      %p39 = scmp.ne.s32.totalorder %s28, %s29
      %p40 = scmp.eq.s32.totalorder %s20, 0
      %p41 = por %p39, %p40
      %p42 = scmp.ne.s32.totalorder %s28, %s29
      %p43 = scmp.eq.s32.totalorder %s21, 1
      %p44 = por %p42, %p43
      %p46 = scmp.ne.s32.totalorder %s29, %s45
      %p47 = scmp.eq.s32.totalorder %s21, 0
      %p48 = por %p46, %p47
      %s50 = sadd.s32 %s49, 1
      %p53 = scmp.eq.s32.totalorder %s15, 1
      %p54 = scmp.ne.s32.totalorder %s49, %s51
      %p55 = scmp.eq.s32.totalorder %s15, 0
      %p56 = por %p54, %p55
      %p57 = scmp.ne.s32.totalorder %s49, %s51
      %p58 = scmp.eq.s32.totalorder %s20, 1
      %p59 = por %p57, %p58
      %p60 = scmp.ne.s32.totalorder %s51, %s52
      %p61 = scmp.eq.s32.totalorder %s20, 0
      %p62 = por %p60, %p61
      %p63 = scmp.ne.s32.totalorder %s51, %s52
      %p64 = scmp.eq.s32.totalorder %s21, 1
      %p65 = por %p63, %p64
      %p67 = scmp.ne.s32.totalorder %s52, %s66
      %p68 = scmp.eq.s32.totalorder %s21, 0
      %p69 = por %p67, %p68
      %s71 = sadd.s32 %s70, 1
      %p74 = scmp.eq.s32.totalorder %s15, 1
      %p75 = scmp.ne.s32.totalorder %s70, %s72
      %p76 = scmp.eq.s32.totalorder %s15, 0
      %p77 = por %p75, %p76
      %p78 = scmp.ne.s32.totalorder %s70, %s72
      %p79 = scmp.eq.s32.totalorder %s20, 1
      %p80 = por %p78, %p79
      %p81 = scmp.ne.s32.totalorder %s72, %s73
      %p82 = scmp.eq.s32.totalorder %s20, 0
      %p83 = por %p81, %p82
      %p84 = scmp.ne.s32.totalorder %s72, %s73
      %p85 = scmp.eq.s32.totalorder %s21, 1
      %p86 = por %p84, %p85
      %p88 = scmp.ne.s32.totalorder %s73, %s87
      %p89 = scmp.eq.s32.totalorder %s21, 0
      %p90 = por %p88, %p89
      %s92 = sadd.s32 %s91, 1
      %p95 = scmp.eq.s32.totalorder %s15, 1
      %p96 = scmp.ne.s32.totalorder %s91, %s93
      %p97 = scmp.eq.s32.totalorder %s15, 0
      %p98 = por %p96, %p97
      %p99 = scmp.ne.s32.totalorder %s91, %s93
      %p100 = scmp.eq.s32.totalorder %s20, 1
      %p101 = por %p99, %p100
      %p102 = scmp.ne.s32.totalorder %s93, %s94
      %p103 = scmp.eq.s32.totalorder %s20, 0
      %p104 = por %p102, %p103
      %p105 = scmp.ne.s32.totalorder %s93, %s94
      %p106 = scmp.eq.s32.totalorder %s21, 1
      %p107 = por %p105, %p106
      %p109 = scmp.ne.s32.totalorder %s94, %s108
      %p110 = scmp.eq.s32.totalorder %s21, 0
      %p111 = por %p109, %p110
      %s113 = sadd.s32 %s112, 1
      %p116 = scmp.eq.s32.totalorder %s15, 1
      %p117 = scmp.ne.s32.totalorder %s112, %s114
      %p118 = scmp.eq.s32.totalorder %s15, 0
      %p119 = por %p117, %p118
      %p120 = scmp.ne.s32.totalorder %s112, %s114
      %p121 = scmp.eq.s32.totalorder %s20, 1
      %p122 = por %p120, %p121
      %p123 = scmp.ne.s32.totalorder %s114, %s115
      %p124 = scmp.eq.s32.totalorder %s20, 0
      %p125 = por %p123, %p124
      %p126 = scmp.ne.s32.totalorder %s114, %s115
      %p127 = scmp.eq.s32.totalorder %s21, 1
      %p128 = por %p126, %p127
      %p130 = scmp.ne.s32.totalorder %s115, %s129
      %p131 = scmp.eq.s32.totalorder %s21, 0
      %p132 = por %p130, %p131
      %s134 = sadd.s32 %s133, 1
      %p137 = scmp.eq.s32.totalorder %s15, 1
      %p138 = scmp.ne.s32.totalorder %s133, %s135
      %p139 = scmp.eq.s32.totalorder %s15, 0
      %p140 = por %p138, %p139
      %p141 = scmp.ne.s32.totalorder %s133, %s135
      %p142 = scmp.eq.s32.totalorder %s20, 1
      %p143 = por %p141, %p142
      %p144 = scmp.ne.s32.totalorder %s135, %s136
      %p145 = scmp.eq.s32.totalorder %s20, 0
      %p146 = por %p144, %p145
      %p147 = scmp.ne.s32.totalorder %s135, %s136
      %p148 = scmp.eq.s32.totalorder %s21, 1
      %p149 = por %p147, %p148
      %p151 = scmp.ne.s32.totalorder %s136, %s150
      %p152 = scmp.eq.s32.totalorder %s21, 0
      %p153 = por %p151, %p152
      %s154 = ssub.s32 %s15, %s22
      %p155 = scmp.eq.s32.totalorder %s154, 0
      %s157 = sadd.s32 %s156, 1
      %s158 = scalar_select %p155, %s156, %s157
      %p161 = pneg %p155
      %p162 = scmp.eq.s32.totalorder %s15, 1
      %p163 = por %p161, %p162
      %p164 = scmp.ne.s32.totalorder %s156, %s159
      %p165 = scmp.eq.s32.totalorder %s15, 0
      %p166 = por %p164, %p165
      %p167 = scmp.ne.s32.totalorder %s156, %s159
      %p168 = scmp.eq.s32.totalorder %s20, 1
      %p169 = por %p167, %p168
      %p170 = scmp.ne.s32.totalorder %s159, %s160
      %p171 = scmp.eq.s32.totalorder %s20, 0
      %p172 = por %p170, %p171
      %p173 = scmp.ne.s32.totalorder %s159, %s160
      %p174 = scmp.eq.s32.totalorder %s21, 1
      %p175 = por %p173, %p174
      %p177 = scmp.ne.s32.totalorder %s160, %s176
      %p178 = scmp.eq.s32.totalorder %s21, 0
      %p179 = por %p177, %p178
      %p180 = scmp.le.s32.totalorder 1, %s15
      %p181 = scmp.lt.s32.totalorder %s15, 3
      %p182 = pnand %p180, %p181
      %p183 = pneg %p182
      // Predicated region
      $region9: #{tpu_custom_call.1} parent=5 // pred_check
        _
      $region10: #{tpu_custom_call.1} parent=5 // pred_check_branch
        %185 = sbr.rel (%p182) target = $region12
      $region11: #{tpu_custom_call.1} parent=5 // pred_region
        %s186 = ssub.s32 %s15, 1
        // Predicated region
        $region13: #{tpu_custom_call.1} parent=11 // pred_check
          %p187 = pneg %p62
        $region14: #{tpu_custom_call.1} parent=11 // pred_check_branch
          %189 = sbr.rel (%p187) target = $region16
        $region15: #{tpu_custom_call.1} parent=11 // pred_region
          _
        $region16: #{tpu_custom_call.1} parent=11 // pred_fallthru
          _
        // Predicated region
        $region17: #{tpu_custom_call.1} parent=11 // pred_check
          %p190 = pneg %p83
        $region18: #{tpu_custom_call.1} parent=11 // pred_check_branch
          %192 = sbr.rel (%p190) target = $region20
        $region19: #{tpu_custom_call.1} parent=11 // pred_region
          _
        $region20: #{tpu_custom_call.1} parent=11 // pred_fallthru
          _
        // Predicated region
        $region21: #{tpu_custom_call.1} parent=11 // pred_check
          %p193 = pneg %p104
        $region22: #{tpu_custom_call.1} parent=11 // pred_check_branch
          %195 = sbr.rel (%p193) target = $region24
        $region23: #{tpu_custom_call.1} parent=11 // pred_region
          _
        $region24: #{tpu_custom_call.1} parent=11 // pred_fallthru
          _
        // Predicated region
        $region25: #{tpu_custom_call.1} parent=11 // pred_check
          %p196 = pneg %p125
        $region26: #{tpu_custom_call.1} parent=11 // pred_check_branch
          %198 = sbr.rel (%p196) target = $region28
        $region27: #{tpu_custom_call.1} parent=11 // pred_region
          _
        $region28: #{tpu_custom_call.1} parent=11 // pred_fallthru
          _
        // Predicated region
        $region29: #{tpu_custom_call.1} parent=11 // pred_check
          %p199 = pneg %p146
        $region30: #{tpu_custom_call.1} parent=11 // pred_check_branch
          %201 = sbr.rel (%p199) target = $region32
        $region31: #{tpu_custom_call.1} parent=11 // pred_region
          _
        $region32: #{tpu_custom_call.1} parent=11 // pred_fallthru
          _
      $region12: #{tpu_custom_call.1} parent=5 // pred_fallthru
        _
      %p202 = scmp.lt.s32.totalorder %s15, 2
      // Predicated region
      $region33: #{tpu_custom_call.1} parent=5 // pred_check
        %p203 = pneg %p202
      $region34: #{tpu_custom_call.1} parent=5 // pred_check_branch
        %205 = sbr.rel (%p203) target = $region36
      $region35: #{tpu_custom_call.1} parent=5 // pred_region
        // Predicated region
        $region37: #{tpu_custom_call.1} parent=35 // pred_check
          %p206 = pneg %p35
        $region38: #{tpu_custom_call.1} parent=35 // pred_check_branch
          %208 = sbr.rel (%p206) target = $region40
        $region39: #{tpu_custom_call.1} parent=35 // pred_region
          %p209 = scmp.lt.s32.totalorder %s15, 1
          %s210 = scalar_select %p209, %s15, 1
          %s211 = smul.addr %s210, 8
          %s212 = scalar_lea.vmem %s0, %s211
        $region40: #{tpu_custom_call.1} parent=35 // pred_fallthru
          _
      $region36: #{tpu_custom_call.1} parent=5 // pred_fallthru
        _
      %p213 = scmp.le.s32.totalorder 1, %s15
      %p214 = scmp.lt.s32.totalorder %s15, 3
      %p215 = pnand %p213, %p214
      %p216 = pneg %p215
      // Predicated region
      $region41: #{tpu_custom_call.1} parent=5 // pred_check
        _
      $region42: #{tpu_custom_call.1} parent=5 // pred_check_branch
        %218 = sbr.rel (%p215) target = $region44
      $region43: #{tpu_custom_call.1} parent=5 // pred_region
        %s219 = ssub.s32 %s15, 1
        %p220 = scmp.lt.s32.totalorder %s20, 1
        %s221 = scalar_select %p220, %s20, 1
        %s222 = smul.addr %s221, 8
        %s223 = scalar_lea.vmem %s0, %s222
        %p224 = pneg %p41
        %p225 = pneg %p38
        %p226 = pneg %p62
        %p227 = pneg %p59
        %p228 = pneg %p83
        %p229 = pneg %p80
        %p230 = pneg %p104
        %p231 = pneg %p101
        %p232 = pneg %p125
        %p233 = pneg %p122
        %p234 = pneg %p146
        %p235 = pneg %p143
        %p236 = pneg %p172
        %p237 = pneg %p169
        %s238 = sand.u32 %s159, 1
        %s239 = scalar_lea.sflag [#allocation3], %s238
        %s240 = sand.u32 %s159, 1
        %s241 = smul.addr %s240, 8
        %s242 = scalar_lea.vmem [#allocation2], %s241
        %p243 = scmp.lt.s32.totalorder %s20, 1
        %s244 = scalar_select %p243, %s20, 1
        %s245 = smul.addr %s244, 8
        %s246 = scalar_lea.vmem %s0, %s245
        %v248 = vld [vmem:[%s246] sm:$0xff]
        %v249 = vld [vmem:[%s1] sm:$0xf]
        %v250 = vld [vmem:[%s1 + $0x4] sm:$0xf]
        %v251 = vld [vmem:[%s2] sm:$0xf]
        %v252 = vld [vmem:[%s2 + $0x4] sm:$0xf]
        %v253 = vld [vmem:[%s3] sm:$0xf]
        %v254 = vld [vmem:[%s3 + $0x4] sm:$0xf]
        %v255 = vld [vmem:[%s4] sm:$0xf]
        %v256 = vld [vmem:[%s4 + $0x4] sm:$0xf]
        %v257 = vld [vmem:[%s4 + $0x8] sm:$0xf]
        %v258 = vld [vmem:[%s4 + $0xc] sm:$0xf]
        %v259 = vld [vmem:[%s4 + $0x10] sm:$0xf]
        %v260 = vld [vmem:[%s4 + $0x14] sm:$0xf]
        %v261 = vld [vmem:[%s4 + $0x18] sm:$0xf]
        %v262 = vld [vmem:[%s4 + $0x1c] sm:$0xf]
        %v263 = vld [vmem:[%s5] sm:$0xff]
        %vm264 = vcmask 130048
        %v265 = vsel %vm264, %v248, 0.0
        %266 = vadd.xlane.f32.xlu0 %v265
        %v267 = vpop.xlane.xlu0 %266
        %v268 = vrcp.pop 16.0
        %v269 = vmul.f32 %v267, %v268
        %v270 = vsub.f32 %v248, %v269
        %v271 = vmul.f32 %v270, %v270
        %v272 = vsel %vm264, %v271, 0.0
        %273 = vadd.xlane.f32.xlu0 %v272
        %v274 = vpop.xlane.xlu0 %273
        %v275 = vmul.f32 %v274, %v268
        %v276 = vadd.f32 %v275, 1e-05
        %v277 = vrsqrt.pop %v276
        %v278 = vmul.f32 %v270, %v277
        %v279 = vpack.c.bf16 %v278, %v278
        %v280 = vlaneseq
        %v281 = vshrl.u32 %v280, 7
        %v282 = vsub.s32 0, %v281
        %v283 = vrot.slane %v263, %v282
        %v286 = vunpack.c.l.b16 %v249
        %v287 = vunpack.c.l.b16 %v250
        %v288 = vpack.c.b16 %v287, %v286
        %v291 = vsel %vm264, %v279, 0
        %293 = vmatprep.subr.bf16.mxu0 0
        %294 = vmatpush1.bf16.msra.mxu0 0
        %295 = vmatprep.subr.bf16.mxu0 0
        %296 = vmatpush1.bf16.msra.mxu0 0
        %297 = vmatprep.subr.bf16.mxu0 0
        %298 = vmatpush1.bf16.msra.mxu0 0
        %299 = vmatprep.subr.bf16.mxu0 0
        %300 = vmatpush1.bf16.msra.mxu0 0
        %301 = vmatprep.subr.bf16.mxu0 0
        %302 = vmatpush1.bf16.msra.mxu0 0
        %303 = vmatprep.subr.bf16.mxu0 0
        %304 = vmatpush1.bf16.msra.mxu0 0
        %305 = vmatprep.subr.bf16.mxu0 0
        %306 = vmatpush1.bf16.msra.mxu0 0
        %307 = vmatprep.subr.bf16.mxu0 0
        %308 = vmatpush1.bf16.msra.mxu0 %v288
        %309 = vmatprep.subr.bf16.mxu0 0
        %310 = vmatpush2.bf16.msra.mxu0 0
        %311 = vmatprep.subr.bf16.mxu0 0
        %312 = vmatpush2.bf16.msra.mxu0 0
        %313 = vmatprep.subr.bf16.mxu0 0
        %314 = vmatpush2.bf16.msra.mxu0 0
        %315 = vmatprep.subr.bf16.mxu0 0
        %316 = vmatpush2.bf16.msra.mxu0 0
        %317 = vmatprep.subr.bf16.mxu0 0
        %318 = vmatpush2.bf16.msra.mxu0 0
        %319 = vmatprep.subr.bf16.mxu0 0
        %320 = vmatpush2.bf16.msra.mxu0 0
        %321 = vmatprep.subr.bf16.mxu0 0
        %322 = vmatpush2.bf16.msra.mxu0 0
        %323 = vmatprep.subr.bf16.mxu0 0
        %324 = vmatpush2.bf16.msra.mxu0 0
        %325 = vmatprep.mubr.bf16.mxu0 0
        %326 = vmatmul.mubr.bf16.gmra.mxu0 %v291
        %v327 = vpop.f32.mrf.mxu0
        %v328 = vadd.f32 %v283, %v327
        %v329 = vpop.f32.mrf.mxu0
        %v330 = vpop.f32.mrf.mxu0
        %v331 = vpop.f32.mrf.mxu0
        %332 = vdwg.mxu0
        %v333 = vpack.c.bf16 %v328, %v328
        %v334 = vlaneseq
        %v335 = vand.u32 %v334, 127
        %v336 = vshra.s32 %v335, 2
        %vm337 = vcmp.eq.s32.totalorder %v336, 0
        %v338 = vsel %vm337, 1, 0
        %v339 = vcvt.s32.f32 %v338
        %vm340 = vcmp.eq.s32.totalorder %v336, 1
        %v341 = vsel %vm340, 1, 0
        %v342 = vcvt.s32.f32 %v341
        %vm343 = vcmp.eq.s32.totalorder %v336, 2
        %v344 = vsel %vm343, 1, 0
        %v345 = vcvt.s32.f32 %v344
        %vm346 = vcmp.eq.s32.totalorder %v336, 3
        %v347 = vsel %vm346, 1, 0
        %v348 = vcvt.s32.f32 %v347
        %v349 = vmul.f32 %v328, %v339
        %v350 = vpack.c.bf16 %v349, %v349
        %352 = vrot.lane.b32.xlu0 %v333, 112
        %v353 = vpop.permute.xlu0 %352
        %v355 = vsel %vm264, %v350, 0
        %v358 = vsel %vm264, %v353, 0
        %360 = vmatprep.subr.bf16.mxu0 0
        %361 = vmatpush1.bf16.xpose.msra.mxu0 0
        %362 = vmatprep.subr.bf16.mxu0 0
        %363 = vmatpush1.bf16.xpose.msra.mxu0 0
        %364 = vmatprep.subr.bf16.mxu0 0
        %365 = vmatpush1.bf16.xpose.msra.mxu0 0
        %366 = vmatprep.subr.bf16.mxu0 0
        %367 = vmatpush1.bf16.xpose.msra.mxu0 0
        %368 = vmatprep.subr.bf16.mxu0 0
        %369 = vmatpush1.bf16.xpose.msra.mxu0 0
        %370 = vmatprep.subr.bf16.mxu0 0
        %371 = vmatpush1.bf16.xpose.msra.mxu0 0
        %372 = vmatprep.subr.bf16.mxu0 0
        %373 = vmatpush1.bf16.xpose.msra.mxu0 0
        %374 = vmatprep.subr.bf16.mxu0 0
        %375 = vmatpush1.bf16.xpose.msra.mxu0 %v358
        %376 = vmatprep.subr.bf16.mxu0 0
        %377 = vmatpush2.bf16.xpose.msra.mxu0 0
        %378 = vmatprep.subr.bf16.mxu0 0
        %379 = vmatpush2.bf16.xpose.msra.mxu0 0
        %380 = vmatprep.subr.bf16.mxu0 0
        %381 = vmatpush2.bf16.xpose.msra.mxu0 0
        %382 = vmatprep.subr.bf16.mxu0 0
        %383 = vmatpush2.bf16.xpose.msra.mxu0 0
        %384 = vmatprep.subr.bf16.mxu0 0
        %385 = vmatpush2.bf16.xpose.msra.mxu0 0
        %386 = vmatprep.subr.bf16.mxu0 0
        %387 = vmatpush2.bf16.xpose.msra.mxu0 0
        %388 = vmatprep.subr.bf16.mxu0 0
        %389 = vmatpush2.bf16.xpose.msra.mxu0 0
        %390 = vmatprep.subr.bf16.mxu0 0
        %391 = vmatpush2.bf16.xpose.msra.mxu0 0
        %392 = vmatprep.mubr.bf16.mxu0 0
        %393 = vmatmul.mubr.bf16.gmra.mxu0 %v355
        %v394 = vpop.f32.mrf.mxu0
        %v395 = vadd.f32 0.0, %v394
        %v396 = vpop.f32.mrf.mxu0
        %v397 = vpop.f32.mrf.mxu0
        %v398 = vpop.f32.mrf.mxu0
        %399 = vdwg.mxu0
        %vm400 = vcmask 64512
        %v401 = vsel %vm400, %v395, -inf
        %402 = vmax.xlane.f32.xlu0 %v401
        %v403 = vpop.xlane.xlu0 %402
        %v404 = vsub.f32 %v395, %v403
        %v405 = vmul.f32 %v404, 1.442695
        %v406 = vpow.pop %v405
        %v407 = vsel %vm400, %v406, 0.0
        %408 = vadd.xlane.f32.xlu0 %v407
        %v409 = vpop.xlane.xlu0 %408
        %v410 = vrcp.pop %v409
        %412 = vrot.lane.b32.xlu0 %v339, 32
        %v413 = vpop.permute.xlu0 %412
        %v415 = vmul.f32 %v328, %v413
        %v416 = vpack.c.bf16 %v415, %v415
        %v417 = vpack.c.bf16 %v406, %v406
        %419 = vrot.lane.b32.xlu0 %v416, 96
        %v420 = vpop.permute.xlu0 %419
        %v422 = vsel %vm400, %v417, 0
        %vm424 = vcmask 1043456
        %v426 = vsel %vm424, %v420, 0
        %428 = vmatprep.subr.bf16.mxu0 0
        %429 = vmatpush1.bf16.msra.mxu0 0
        %430 = vmatprep.subr.bf16.mxu0 0
        %431 = vmatpush1.bf16.msra.mxu0 0
        %432 = vmatprep.subr.bf16.mxu0 0
        %433 = vmatpush1.bf16.msra.mxu0 0
        %434 = vmatprep.subr.bf16.mxu0 0
        %435 = vmatpush1.bf16.msra.mxu0 0
        %436 = vmatprep.subr.bf16.mxu0 0
        %437 = vmatpush1.bf16.msra.mxu0 0
        %438 = vmatprep.subr.bf16.mxu0 0
        %439 = vmatpush1.bf16.msra.mxu0 0
        %440 = vmatprep.subr.bf16.mxu0 0
        %441 = vmatpush1.bf16.msra.mxu0 0
        %442 = vmatprep.subr.bf16.mxu0 0
        %443 = vmatpush1.bf16.msra.mxu0 %v426
        %444 = vmatprep.subr.bf16.mxu0 0
        %445 = vmatpush2.bf16.msra.mxu0 0
        %446 = vmatprep.subr.bf16.mxu0 0
        %447 = vmatpush2.bf16.msra.mxu0 0
        %448 = vmatprep.subr.bf16.mxu0 0
        %449 = vmatpush2.bf16.msra.mxu0 0
        %450 = vmatprep.subr.bf16.mxu0 0
        %451 = vmatpush2.bf16.msra.mxu0 0
        %452 = vmatprep.subr.bf16.mxu0 0
        %453 = vmatpush2.bf16.msra.mxu0 0
        %454 = vmatprep.subr.bf16.mxu0 0
        %455 = vmatpush2.bf16.msra.mxu0 0
        %456 = vmatprep.subr.bf16.mxu0 0
        %457 = vmatpush2.bf16.msra.mxu0 0
        %458 = vmatprep.subr.bf16.mxu0 0
        %459 = vmatpush2.bf16.msra.mxu0 0
        %460 = vmatprep.mubr.bf16.mxu0 0
        %461 = vmatmul.mubr.bf16.gmra.mxu0 %v422
        %v462 = vpop.f32.mrf.mxu0
        %v463 = vadd.f32 0.0, %v462
        %v464 = vpop.f32.mrf.mxu0
        %v465 = vpop.f32.mrf.mxu0
        %v466 = vpop.f32.mrf.mxu0
        %467 = vdwg.mxu0
        %v468 = vmul.f32 %v463, %v410
        %v469 = vadd.f32 %v468, 0.0
        %v470 = vmul.f32 %v328, %v342
        %v471 = vpack.c.bf16 %v470, %v470
        %v473 = vsel %vm264, %v471, 0
        %475 = vmatprep.subr.bf16.mxu0 0
        %476 = vmatpush1.bf16.xpose.msra.mxu0 0
        %477 = vmatprep.subr.bf16.mxu0 0
        %478 = vmatpush1.bf16.xpose.msra.mxu0 0
        %479 = vmatprep.subr.bf16.mxu0 0
        %480 = vmatpush1.bf16.xpose.msra.mxu0 0
        %481 = vmatprep.subr.bf16.mxu0 0
        %482 = vmatpush1.bf16.xpose.msra.mxu0 0
        %483 = vmatprep.subr.bf16.mxu0 0
        %484 = vmatpush1.bf16.xpose.msra.mxu0 0
        %485 = vmatprep.subr.bf16.mxu0 0
        %486 = vmatpush1.bf16.xpose.msra.mxu0 0
        %487 = vmatprep.subr.bf16.mxu0 0
        %488 = vmatpush1.bf16.xpose.msra.mxu0 0
        %489 = vmatprep.subr.bf16.mxu0 0
        %490 = vmatpush1.bf16.xpose.msra.mxu0 %v358
        %491 = vmatprep.subr.bf16.mxu0 0
        %492 = vmatpush2.bf16.xpose.msra.mxu0 0
        %493 = vmatprep.subr.bf16.mxu0 0
        %494 = vmatpush2.bf16.xpose.msra.mxu0 0
        %495 = vmatprep.subr.bf16.mxu0 0
        %496 = vmatpush2.bf16.xpose.msra.mxu0 0
        %497 = vmatprep.subr.bf16.mxu0 0
        %498 = vmatpush2.bf16.xpose.msra.mxu0 0
        %499 = vmatprep.subr.bf16.mxu0 0
        %500 = vmatpush2.bf16.xpose.msra.mxu0 0
        %501 = vmatprep.subr.bf16.mxu0 0
        %502 = vmatpush2.bf16.xpose.msra.mxu0 0
        %503 = vmatprep.subr.bf16.mxu0 0
        %504 = vmatpush2.bf16.xpose.msra.mxu0 0
        %505 = vmatprep.subr.bf16.mxu0 0
        %506 = vmatpush2.bf16.xpose.msra.mxu0 0
        %507 = vmatprep.mubr.bf16.mxu0 0
        %508 = vmatmul.mubr.bf16.gmra.mxu0 %v473
        %v509 = vpop.f32.mrf.mxu0
        %v510 = vadd.f32 0.0, %v509
        %v511 = vpop.f32.mrf.mxu0
        %v512 = vpop.f32.mrf.mxu0
        %v513 = vpop.f32.mrf.mxu0
        %514 = vdwg.mxu0
        %v515 = vsel %vm400, %v510, -inf
        %516 = vmax.xlane.f32.xlu0 %v515
        %v517 = vpop.xlane.xlu0 %516
        %v518 = vsub.f32 %v510, %v517
        %v519 = vmul.f32 %v518, 1.442695
        %v520 = vpow.pop %v519
        %v521 = vsel %vm400, %v520, 0.0
        %522 = vadd.xlane.f32.xlu0 %v521
        %v523 = vpop.xlane.xlu0 %522
        %v524 = vrcp.pop %v523
        %526 = vrot.lane.b32.xlu0 %v342, 32
        %v527 = vpop.permute.xlu0 %526
        %v529 = vmul.f32 %v328, %v527
        %v530 = vpack.c.bf16 %v529, %v529
        %v531 = vpack.c.bf16 %v520, %v520
        %533 = vrot.lane.b32.xlu0 %v530, 96
        %v534 = vpop.permute.xlu0 %533
        %v536 = vsel %vm400, %v531, 0
        %v539 = vsel %vm424, %v534, 0
        %541 = vmatprep.subr.bf16.mxu0 0
        %542 = vmatpush1.bf16.msra.mxu0 0
        %543 = vmatprep.subr.bf16.mxu0 0
        %544 = vmatpush1.bf16.msra.mxu0 0
        %545 = vmatprep.subr.bf16.mxu0 0
        %546 = vmatpush1.bf16.msra.mxu0 0
        %547 = vmatprep.subr.bf16.mxu0 0
        %548 = vmatpush1.bf16.msra.mxu0 0
        %549 = vmatprep.subr.bf16.mxu0 0
        %550 = vmatpush1.bf16.msra.mxu0 0
        %551 = vmatprep.subr.bf16.mxu0 0
        %552 = vmatpush1.bf16.msra.mxu0 0
        %553 = vmatprep.subr.bf16.mxu0 0
        %554 = vmatpush1.bf16.msra.mxu0 0
        %555 = vmatprep.subr.bf16.mxu0 0
        %556 = vmatpush1.bf16.msra.mxu0 %v539
        %557 = vmatprep.subr.bf16.mxu0 0
        %558 = vmatpush2.bf16.msra.mxu0 0
        %559 = vmatprep.subr.bf16.mxu0 0
        %560 = vmatpush2.bf16.msra.mxu0 0
        %561 = vmatprep.subr.bf16.mxu0 0
        %562 = vmatpush2.bf16.msra.mxu0 0
        %563 = vmatprep.subr.bf16.mxu0 0
        %564 = vmatpush2.bf16.msra.mxu0 0
        %565 = vmatprep.subr.bf16.mxu0 0
        %566 = vmatpush2.bf16.msra.mxu0 0
        %567 = vmatprep.subr.bf16.mxu0 0
        %568 = vmatpush2.bf16.msra.mxu0 0
        %569 = vmatprep.subr.bf16.mxu0 0
        %570 = vmatpush2.bf16.msra.mxu0 0
        %571 = vmatprep.subr.bf16.mxu0 0
        %572 = vmatpush2.bf16.msra.mxu0 0
        %573 = vmatprep.mubr.bf16.mxu0 0
        %574 = vmatmul.mubr.bf16.gmra.mxu0 %v536
        %v575 = vpop.f32.mrf.mxu0
        %v576 = vadd.f32 0.0, %v575
        %v577 = vpop.f32.mrf.mxu0
        %v578 = vpop.f32.mrf.mxu0
        %v579 = vpop.f32.mrf.mxu0
        %580 = vdwg.mxu0
        %v581 = vmul.f32 %v576, %v524
        %v582 = vadd.f32 %v469, %v581
        %v583 = vmul.f32 %v328, %v345
        %v584 = vpack.c.bf16 %v583, %v583
        %v586 = vsel %vm264, %v584, 0
        %588 = vmatprep.subr.bf16.mxu0 0
        %589 = vmatpush1.bf16.xpose.msra.mxu0 0
        %590 = vmatprep.subr.bf16.mxu0 0
        %591 = vmatpush1.bf16.xpose.msra.mxu0 0
        %592 = vmatprep.subr.bf16.mxu0 0
        %593 = vmatpush1.bf16.xpose.msra.mxu0 0
        %594 = vmatprep.subr.bf16.mxu0 0
        %595 = vmatpush1.bf16.xpose.msra.mxu0 0
        %596 = vmatprep.subr.bf16.mxu0 0
        %597 = vmatpush1.bf16.xpose.msra.mxu0 0
        %598 = vmatprep.subr.bf16.mxu0 0
        %599 = vmatpush1.bf16.xpose.msra.mxu0 0
        %600 = vmatprep.subr.bf16.mxu0 0
        %601 = vmatpush1.bf16.xpose.msra.mxu0 0
        %602 = vmatprep.subr.bf16.mxu0 0
        %603 = vmatpush1.bf16.xpose.msra.mxu0 %v358
        %604 = vmatprep.subr.bf16.mxu0 0
        %605 = vmatpush2.bf16.xpose.msra.mxu0 0
        %606 = vmatprep.subr.bf16.mxu0 0
        %607 = vmatpush2.bf16.xpose.msra.mxu0 0
        %608 = vmatprep.subr.bf16.mxu0 0
        %609 = vmatpush2.bf16.xpose.msra.mxu0 0
        %610 = vmatprep.subr.bf16.mxu0 0
        %611 = vmatpush2.bf16.xpose.msra.mxu0 0
        %612 = vmatprep.subr.bf16.mxu0 0
        %613 = vmatpush2.bf16.xpose.msra.mxu0 0
        %614 = vmatprep.subr.bf16.mxu0 0
        %615 = vmatpush2.bf16.xpose.msra.mxu0 0
        %616 = vmatprep.subr.bf16.mxu0 0
        %617 = vmatpush2.bf16.xpose.msra.mxu0 0
        %618 = vmatprep.subr.bf16.mxu0 0
        %619 = vmatpush2.bf16.xpose.msra.mxu0 0
        %620 = vmatprep.mubr.bf16.mxu0 0
        %621 = vmatmul.mubr.bf16.gmra.mxu0 %v586
        %v622 = vpop.f32.mrf.mxu0
        %v623 = vadd.f32 0.0, %v622
        %v624 = vpop.f32.mrf.mxu0
        %v625 = vpop.f32.mrf.mxu0
        %v626 = vpop.f32.mrf.mxu0
        %627 = vdwg.mxu0
        %v628 = vsel %vm400, %v623, -inf
        %629 = vmax.xlane.f32.xlu0 %v628
        %v630 = vpop.xlane.xlu0 %629
        %v631 = vsub.f32 %v623, %v630
        %v632 = vmul.f32 %v631, 1.442695
        %v633 = vpow.pop %v632
        %v634 = vsel %vm400, %v633, 0.0
        %635 = vadd.xlane.f32.xlu0 %v634
        %v636 = vpop.xlane.xlu0 %635
        %v637 = vrcp.pop %v636
        %639 = vrot.lane.b32.xlu0 %v345, 32
        %v640 = vpop.permute.xlu0 %639
        %v642 = vmul.f32 %v328, %v640
        %v643 = vpack.c.bf16 %v642, %v642
        %v644 = vpack.c.bf16 %v633, %v633
        %646 = vrot.lane.b32.xlu0 %v643, 96
        %v647 = vpop.permute.xlu0 %646
        %v649 = vsel %vm400, %v644, 0
        %v652 = vsel %vm424, %v647, 0
        %654 = vmatprep.subr.bf16.mxu0 0
        %655 = vmatpush1.bf16.msra.mxu0 0
        %656 = vmatprep.subr.bf16.mxu0 0
        %657 = vmatpush1.bf16.msra.mxu0 0
        %658 = vmatprep.subr.bf16.mxu0 0
        %659 = vmatpush1.bf16.msra.mxu0 0
        %660 = vmatprep.subr.bf16.mxu0 0
        %661 = vmatpush1.bf16.msra.mxu0 0
        %662 = vmatprep.subr.bf16.mxu0 0
        %663 = vmatpush1.bf16.msra.mxu0 0
        %664 = vmatprep.subr.bf16.mxu0 0
        %665 = vmatpush1.bf16.msra.mxu0 0
        %666 = vmatprep.subr.bf16.mxu0 0
        %667 = vmatpush1.bf16.msra.mxu0 0
        %668 = vmatprep.subr.bf16.mxu0 0
        %669 = vmatpush1.bf16.msra.mxu0 %v652
        %670 = vmatprep.subr.bf16.mxu0 0
        %671 = vmatpush2.bf16.msra.mxu0 0
        %672 = vmatprep.subr.bf16.mxu0 0
        %673 = vmatpush2.bf16.msra.mxu0 0
        %674 = vmatprep.subr.bf16.mxu0 0
        %675 = vmatpush2.bf16.msra.mxu0 0
        %676 = vmatprep.subr.bf16.mxu0 0
        %677 = vmatpush2.bf16.msra.mxu0 0
        %678 = vmatprep.subr.bf16.mxu0 0
        %679 = vmatpush2.bf16.msra.mxu0 0
        %680 = vmatprep.subr.bf16.mxu0 0
        %681 = vmatpush2.bf16.msra.mxu0 0
        %682 = vmatprep.subr.bf16.mxu0 0
        %683 = vmatpush2.bf16.msra.mxu0 0
        %684 = vmatprep.subr.bf16.mxu0 0
        %685 = vmatpush2.bf16.msra.mxu0 0
        %686 = vmatprep.mubr.bf16.mxu0 0
        %687 = vmatmul.mubr.bf16.gmra.mxu0 %v649
        %v688 = vpop.f32.mrf.mxu0
        %v689 = vadd.f32 0.0, %v688
        %v690 = vpop.f32.mrf.mxu0
        %v691 = vpop.f32.mrf.mxu0
        %v692 = vpop.f32.mrf.mxu0
        %693 = vdwg.mxu0
        %v694 = vmul.f32 %v689, %v637
        %v695 = vadd.f32 %v582, %v694
        %v696 = vmul.f32 %v328, %v348
        %v697 = vpack.c.bf16 %v696, %v696
        %v699 = vsel %vm264, %v697, 0
        %701 = vmatprep.subr.bf16.mxu0 0
        %702 = vmatpush1.bf16.xpose.msra.mxu0 0
        %703 = vmatprep.subr.bf16.mxu0 0
        %704 = vmatpush1.bf16.xpose.msra.mxu0 0
        %705 = vmatprep.subr.bf16.mxu0 0
        %706 = vmatpush1.bf16.xpose.msra.mxu0 0
        %707 = vmatprep.subr.bf16.mxu0 0
        %708 = vmatpush1.bf16.xpose.msra.mxu0 0
        %709 = vmatprep.subr.bf16.mxu0 0
        %710 = vmatpush1.bf16.xpose.msra.mxu0 0
        %711 = vmatprep.subr.bf16.mxu0 0
        %712 = vmatpush1.bf16.xpose.msra.mxu0 0
        %713 = vmatprep.subr.bf16.mxu0 0
        %714 = vmatpush1.bf16.xpose.msra.mxu0 0
        %715 = vmatprep.subr.bf16.mxu0 0
        %716 = vmatpush1.bf16.xpose.msra.mxu0 %v358
        %717 = vmatprep.subr.bf16.mxu0 0
        %718 = vmatpush2.bf16.xpose.msra.mxu0 0
        %719 = vmatprep.subr.bf16.mxu0 0
        %720 = vmatpush2.bf16.xpose.msra.mxu0 0
        %721 = vmatprep.subr.bf16.mxu0 0
        %722 = vmatpush2.bf16.xpose.msra.mxu0 0
        %723 = vmatprep.subr.bf16.mxu0 0
        %724 = vmatpush2.bf16.xpose.msra.mxu0 0
        %725 = vmatprep.subr.bf16.mxu0 0
        %726 = vmatpush2.bf16.xpose.msra.mxu0 0
        %727 = vmatprep.subr.bf16.mxu0 0
        %728 = vmatpush2.bf16.xpose.msra.mxu0 0
        %729 = vmatprep.subr.bf16.mxu0 0
        %730 = vmatpush2.bf16.xpose.msra.mxu0 0
        %731 = vmatprep.subr.bf16.mxu0 0
        %732 = vmatpush2.bf16.xpose.msra.mxu0 0
        %733 = vmatprep.mubr.bf16.mxu0 0
        %734 = vmatmul.mubr.bf16.gmra.mxu0 %v699
        %v735 = vpop.f32.mrf.mxu0
        %v736 = vadd.f32 0.0, %v735
        %v737 = vpop.f32.mrf.mxu0
        %v738 = vpop.f32.mrf.mxu0
        %v739 = vpop.f32.mrf.mxu0
        %740 = vdwg.mxu0
        %v741 = vsel %vm400, %v736, -inf
        %742 = vmax.xlane.f32.xlu0 %v741
        %v743 = vpop.xlane.xlu0 %742
        %v744 = vsub.f32 %v736, %v743
        %v745 = vmul.f32 %v744, 1.442695
        %v746 = vpow.pop %v745
        %v747 = vsel %vm400, %v746, 0.0
        %748 = vadd.xlane.f32.xlu0 %v747
        %v749 = vpop.xlane.xlu0 %748
        %v750 = vrcp.pop %v749
        %752 = vrot.lane.b32.xlu0 %v348, 32
        %v753 = vpop.permute.xlu0 %752
        %v755 = vmul.f32 %v328, %v753
        %v756 = vpack.c.bf16 %v755, %v755
        %v757 = vpack.c.bf16 %v746, %v746
        %759 = vrot.lane.b32.xlu0 %v756, 96
        %v760 = vpop.permute.xlu0 %759
        %v762 = vsel %vm400, %v757, 0
        %v765 = vsel %vm424, %v760, 0
        %767 = vmatprep.subr.bf16.mxu0 0
        %768 = vmatpush1.bf16.msra.mxu0 0
        %769 = vmatprep.subr.bf16.mxu0 0
        %770 = vmatpush1.bf16.msra.mxu0 0
        %771 = vmatprep.subr.bf16.mxu0 0
        %772 = vmatpush1.bf16.msra.mxu0 0
        %773 = vmatprep.subr.bf16.mxu0 0
        %774 = vmatpush1.bf16.msra.mxu0 0
        %775 = vmatprep.subr.bf16.mxu0 0
        %776 = vmatpush1.bf16.msra.mxu0 0
        %777 = vmatprep.subr.bf16.mxu0 0
        %778 = vmatpush1.bf16.msra.mxu0 0
        %779 = vmatprep.subr.bf16.mxu0 0
        %780 = vmatpush1.bf16.msra.mxu0 0
        %781 = vmatprep.subr.bf16.mxu0 0
        %782 = vmatpush1.bf16.msra.mxu0 %v765
        %783 = vmatprep.subr.bf16.mxu0 0
        %784 = vmatpush2.bf16.msra.mxu0 0
        %785 = vmatprep.subr.bf16.mxu0 0
        %786 = vmatpush2.bf16.msra.mxu0 0
        %787 = vmatprep.subr.bf16.mxu0 0
        %788 = vmatpush2.bf16.msra.mxu0 0
        %789 = vmatprep.subr.bf16.mxu0 0
        %790 = vmatpush2.bf16.msra.mxu0 0
        %791 = vmatprep.subr.bf16.mxu0 0
        %792 = vmatpush2.bf16.msra.mxu0 0
        %793 = vmatprep.subr.bf16.mxu0 0
        %794 = vmatpush2.bf16.msra.mxu0 0
        %795 = vmatprep.subr.bf16.mxu0 0
        %796 = vmatpush2.bf16.msra.mxu0 0
        %797 = vmatprep.subr.bf16.mxu0 0
        %798 = vmatpush2.bf16.msra.mxu0 0
        %799 = vmatprep.mubr.bf16.mxu0 0
        %800 = vmatmul.mubr.bf16.gmra.mxu0 %v762
        %v801 = vpop.f32.mrf.mxu0
        %v802 = vadd.f32 0.0, %v801
        %v803 = vpop.f32.mrf.mxu0
        %v804 = vpop.f32.mrf.mxu0
        %v805 = vpop.f32.mrf.mxu0
        %806 = vdwg.mxu0
        %v807 = vmul.f32 %v802, %v750
        %v808 = vadd.f32 %v695, %v807
        %v809 = vpack.c.bf16 %v808, %v808
        %v810 = vlaneseq
        %v811 = vshrl.u32 %v810, 7
        %v812 = vsub.s32 1, %v811
        %v813 = vrot.slane %v263, %v812
        %v816 = vunpack.c.l.b16 %v251
        %v817 = vunpack.c.l.b16 %v252
        %v818 = vpack.c.b16 %v817, %v816
        %v821 = vsel %vm264, %v809, 0
        %823 = vmatprep.subr.bf16.mxu0 0
        %824 = vmatpush1.bf16.msra.mxu0 0
        %825 = vmatprep.subr.bf16.mxu0 0
        %826 = vmatpush1.bf16.msra.mxu0 0
        %827 = vmatprep.subr.bf16.mxu0 0
        %828 = vmatpush1.bf16.msra.mxu0 0
        %829 = vmatprep.subr.bf16.mxu0 0
        %830 = vmatpush1.bf16.msra.mxu0 0
        %831 = vmatprep.subr.bf16.mxu0 0
        %832 = vmatpush1.bf16.msra.mxu0 0
        %833 = vmatprep.subr.bf16.mxu0 0
        %834 = vmatpush1.bf16.msra.mxu0 0
        %835 = vmatprep.subr.bf16.mxu0 0
        %836 = vmatpush1.bf16.msra.mxu0 0
        %837 = vmatprep.subr.bf16.mxu0 0
        %838 = vmatpush1.bf16.msra.mxu0 %v818
        %839 = vmatprep.subr.bf16.mxu0 0
        %840 = vmatpush2.bf16.msra.mxu0 0
        %841 = vmatprep.subr.bf16.mxu0 0
        %842 = vmatpush2.bf16.msra.mxu0 0
        %843 = vmatprep.subr.bf16.mxu0 0
        %844 = vmatpush2.bf16.msra.mxu0 0
        %845 = vmatprep.subr.bf16.mxu0 0
        %846 = vmatpush2.bf16.msra.mxu0 0
        %847 = vmatprep.subr.bf16.mxu0 0
        %848 = vmatpush2.bf16.msra.mxu0 0
        %849 = vmatprep.subr.bf16.mxu0 0
        %850 = vmatpush2.bf16.msra.mxu0 0
        %851 = vmatprep.subr.bf16.mxu0 0
        %852 = vmatpush2.bf16.msra.mxu0 0
        %853 = vmatprep.subr.bf16.mxu0 0
        %854 = vmatpush2.bf16.msra.mxu0 0
        %855 = vmatprep.mubr.bf16.mxu0 0
        %856 = vmatmul.mubr.bf16.gmra.mxu0 %v821
        %v857 = vpop.f32.mrf.mxu0
        %v858 = vadd.f32 %v813, %v857
        %v859 = vpop.f32.mrf.mxu0
        %v860 = vpop.f32.mrf.mxu0
        %v861 = vpop.f32.mrf.mxu0
        %862 = vdwg.mxu0
        %v863 = vadd.f32 %v858, %v248
        %v864 = vsel %vm264, %v863, 0.0
        %865 = vadd.xlane.f32.xlu0 %v864
        %v866 = vpop.xlane.xlu0 %865
        %v867 = vmul.f32 %v866, %v268
        %v868 = vsub.f32 %v863, %v867
        %v869 = vmul.f32 %v868, %v868
        %v870 = vsel %vm264, %v869, 0.0
        %871 = vadd.xlane.f32.xlu0 %v870
        %v872 = vpop.xlane.xlu0 %871
        %v873 = vmul.f32 %v872, %v268
        %v874 = vadd.f32 %v873, 1e-05
        %v875 = vrsqrt.pop %v874
        %v876 = vmul.f32 %v868, %v875
        %v877 = vpack.c.bf16 %v876, %v876
        %v878 = vlaneseq
        %v879 = vshrl.u32 %v878, 7
        %v880 = vsub.s32 2, %v879
        %v881 = vrot.slane %v263, %v880
        %v884 = vunpack.c.l.b16 %v253
        %v885 = vunpack.c.l.b16 %v254
        %v886 = vpack.c.b16 %v885, %v884
        %v889 = vsel %vm264, %v877, 0
        %891 = vmatprep.subr.bf16.mxu0 0
        %892 = vmatpush1.bf16.msra.mxu0 0
        %893 = vmatprep.subr.bf16.mxu0 0
        %894 = vmatpush1.bf16.msra.mxu0 0
        %895 = vmatprep.subr.bf16.mxu0 0
        %896 = vmatpush1.bf16.msra.mxu0 0
        %897 = vmatprep.subr.bf16.mxu0 0
        %898 = vmatpush1.bf16.msra.mxu0 0
        %899 = vmatprep.subr.bf16.mxu0 0
        %900 = vmatpush1.bf16.msra.mxu0 0
        %901 = vmatprep.subr.bf16.mxu0 0
        %902 = vmatpush1.bf16.msra.mxu0 0
        %903 = vmatprep.subr.bf16.mxu0 0
        %904 = vmatpush1.bf16.msra.mxu0 0
        %905 = vmatprep.subr.bf16.mxu0 0
        %906 = vmatpush1.bf16.msra.mxu0 %v886
        %907 = vmatprep.subr.bf16.mxu0 0
        %908 = vmatpush2.bf16.msra.mxu0 0
        %909 = vmatprep.subr.bf16.mxu0 0
        %910 = vmatpush2.bf16.msra.mxu0 0
        %911 = vmatprep.subr.bf16.mxu0 0
        %912 = vmatpush2.bf16.msra.mxu0 0
        %913 = vmatprep.subr.bf16.mxu0 0
        %914 = vmatpush2.bf16.msra.mxu0 0
        %915 = vmatprep.subr.bf16.mxu0 0
        %916 = vmatpush2.bf16.msra.mxu0 0
        %917 = vmatprep.subr.bf16.mxu0 0
        %918 = vmatpush2.bf16.msra.mxu0 0
        %919 = vmatprep.subr.bf16.mxu0 0
        %920 = vmatpush2.bf16.msra.mxu0 0
        %921 = vmatprep.subr.bf16.mxu0 0
        %922 = vmatpush2.bf16.msra.mxu0 0
        %923 = vmatprep.mubr.bf16.mxu0 0
        %924 = vmatmul.mubr.bf16.gmra.mxu0 %v889
        %v925 = vpop.f32.mrf.mxu0
        %v926 = vadd.f32 %v881, %v925
        %v927 = vpop.f32.mrf.mxu0
        %v928 = vpop.f32.mrf.mxu0
        %v929 = vpop.f32.mrf.mxu0
        %930 = vdwg.mxu0
        %v931 = vmax.f32 %v926, 0.0
        %v932 = vpack.c.bf16 %v931, %v931
        %v933 = vlaneseq
        %v934 = vshrl.u32 %v933, 7
        %v935 = vsub.s32 3, %v934
        %v936 = vrot.slane %v263, %v935
        %v945 = vunpack.c.l.b16 %v255
        %v946 = vunpack.c.l.b16 %v256
        %v947 = vunpack.c.l.b16 %v257
        %v948 = vunpack.c.l.b16 %v258
        %v949 = vunpack.c.l.b16 %v259
        %v950 = vunpack.c.l.b16 %v260
        %v951 = vunpack.c.l.b16 %v261
        %v952 = vunpack.c.l.b16 %v262
        %v953 = vpack.c.b16 %v946, %v945
        %v954 = vpack.c.b16 %v948, %v947
        %v955 = vpack.c.b16 %v950, %v949
        %v956 = vpack.c.b16 %v952, %v951
        %vm961 = vcmask 523264
        %v963 = vsel %vm961, %v932, 0
        %965 = vmatprep.subr.bf16.mxu0 0
        %966 = vmatpush1.bf16.msra.mxu0 0
        %967 = vmatprep.subr.bf16.mxu0 0
        %968 = vmatpush1.bf16.msra.mxu0 0
        %969 = vmatprep.subr.bf16.mxu0 0
        %970 = vmatpush1.bf16.msra.mxu0 0
        %971 = vmatprep.subr.bf16.mxu0 0
        %972 = vmatpush1.bf16.msra.mxu0 0
        %973 = vmatprep.subr.bf16.mxu0 0
        %974 = vmatpush1.bf16.msra.mxu0 %v956
        %975 = vmatprep.subr.bf16.mxu0 0
        %976 = vmatpush1.bf16.msra.mxu0 %v955
        %977 = vmatprep.subr.bf16.mxu0 0
        %978 = vmatpush1.bf16.msra.mxu0 %v954
        %979 = vmatprep.subr.bf16.mxu0 0
        %980 = vmatpush1.bf16.msra.mxu0 %v953
        %981 = vmatprep.subr.bf16.mxu0 0
        %982 = vmatpush2.bf16.msra.mxu0 0
        %983 = vmatprep.subr.bf16.mxu0 0
        %984 = vmatpush2.bf16.msra.mxu0 0
        %985 = vmatprep.subr.bf16.mxu0 0
        %986 = vmatpush2.bf16.msra.mxu0 0
        %987 = vmatprep.subr.bf16.mxu0 0
        %988 = vmatpush2.bf16.msra.mxu0 0
        %989 = vmatprep.subr.bf16.mxu0 0
        %990 = vmatpush2.bf16.msra.mxu0 0
        %991 = vmatprep.subr.bf16.mxu0 0
        %992 = vmatpush2.bf16.msra.mxu0 0
        %993 = vmatprep.subr.bf16.mxu0 0
        %994 = vmatpush2.bf16.msra.mxu0 0
        %995 = vmatprep.subr.bf16.mxu0 0
        %996 = vmatpush2.bf16.msra.mxu0 0
        %997 = vmatprep.mubr.bf16.mxu0 0
        %998 = vmatmul.mubr.bf16.gmra.mxu0 %v963
        %v999 = vpop.f32.mrf.mxu0
        %v1000 = vadd.f32 %v936, %v999
        %v1001 = vpop.f32.mrf.mxu0
        %v1002 = vpop.f32.mrf.mxu0
        %v1003 = vpop.f32.mrf.mxu0
        %1004 = vdwg.mxu0
        %v1005 = vadd.f32 %v863, %v1000
        %1006 = vst.msk [vmem:[%s242] sm:$0xff] %vm264, %v1005
        %s1007 = sand.u32 %s159, 1
        %s1008 = scalar_lea.sflag [#allocation3], %s1007
        %s1009 = sand.u32 %s159, 1
        %s1010 = smul.addr %s1009, 8
        %s1011 = scalar_lea.vmem [#allocation2], %s1010
        // Predicated region
        $region45: #{tpu_custom_call.1} parent=43 // pred_check
          %p1012 = pneg %p169
        $region46: #{tpu_custom_call.1} parent=43 // pred_check_branch
          %1014 = sbr.rel (%p1012) target = $region48
        $region47: #{tpu_custom_call.1} parent=43 // pred_region
          %s1016 = ssub.s32 128, 128
          %1017 = vsyncadd %s1008, %s1016
          %s1018 = smul.addr %s20, 128
          %s1019 = scalar_lea.hbm %s6, %s1018
          %s1021 = sshll.u32 %s1011, 4
          %s1022 = int_to_ptr.vmem [resolvable:$true] %s1021
          %1024 = dma.vmem_to_hbm [thread:$0]  %s1022, 128, %s1019, %s1008
        $region48: #{tpu_custom_call.1} parent=43 // pred_fallthru
          _
      $region44: #{tpu_custom_call.1} parent=5 // pred_fallthru
        _
      %p1025 = scmp.le.s32.totalorder 2, %s15
      // Predicated region
      $region49: #{tpu_custom_call.1} parent=5 // pred_check
        %p1026 = pneg %p1025
      $region50: #{tpu_custom_call.1} parent=5 // pred_check_branch
        %1028 = sbr.rel (%p1026) target = $region52
      $region51: #{tpu_custom_call.1} parent=5 // pred_region
        %s1029 = ssub.s32 %s15, 2
        // Predicated region
        $region53: #{tpu_custom_call.1} parent=51 // pred_check
          %p1030 = pneg %p175
        $region54: #{tpu_custom_call.1} parent=51 // pred_check_branch
          %1032 = sbr.rel (%p1030) target = $region56
        $region55: #{tpu_custom_call.1} parent=51 // pred_region
          %s1033 = sand.u32 %s160, 1
          %s1034 = scalar_lea.sflag [#allocation3], %s1033
          %s1035 = sand.u32 %s160, 1
          %s1036 = smul.addr %s1035, 8
          %s1037 = scalar_lea.vmem [#allocation2], %s1036
          %1038 = dma.done %s1034, 128
        $region56: #{tpu_custom_call.1} parent=51 // pred_fallthru
          _
      $region52: #{tpu_custom_call.1} parent=5 // pred_fallthru
        _
    $region6: #{tpu_custom_call.1} parent=1 // loop_footer
      %s19 = sadd.s32 1, %s15
    $region7: #{tpu_custom_call.1} parent=1 // loop_footer_branch
      %14 = sbr.rel target = $region3
    $region8: #{tpu_custom_call.1} parent=1 // loop_exit
      _
    %1039 = vsyncpa [#allocation3], 1
    %s1040 = scalar_lea.sflag [#allocation3], 1
    %1041 = vsyncpa %s1040, 1

</llo_original>
